<compile_context>
chip_gen: v5e
topology: v5e:2x2
jax: 0.10.0
libtpu: 0.0.40
codegen_flags: <defaults>
</compile_context>

<pallas_src>
import functools

import jax
import jax.numpy as jnp
from jax.experimental import pallas as pl
from jax.experimental.pallas import tpu as pltpu


def _round_up(x, m):
    return ((x + m - 1) // m) * m


def _pick_tile_n(n, desired):
    """Largest tile <= desired, multiple of 8, giving >=2 grid steps if possible."""
    half = _round_up(max(-(-n // 2), 8), 8)
    return max(8, min(desired, half))


# ----------------------------------------------------------------------------
# Fused kernel: encoder -> decoder -> clustering, one batch tile per grid step
# ----------------------------------------------------------------------------
def _dec_fused_kernel(*refs, n_enc, n_dec, approx_recip):
    """refs = [x, w0, b0, ..., w_{L-1}, b_{L-1}, clusters_T, c2, q_out, dec_out].

    x:(tile_n, Din_p) f32   w_l:(din_p, dout_p) param_dtype   b_l:(1, dout_p) f32
    clusters_T:(E_p, K_p) param_dtype   c2:(1, K_p) f32 (padded entries = 1e30)
    q_out:(tile_n, K_p) f32   dec_out:(tile_n, Din_p) f32
    Padded weight/bias entries are zero, so padding contributes nothing; padded
    cluster columns get d ~ 1e30 -> q underflows to 0 before normalization.
    """
    n_layers = n_enc + n_dec
    x_ref = refs[0]
    wb_refs = refs[1:1 + 2 * n_layers]
    ct_ref = refs[1 + 2 * n_layers]
    c2_ref = refs[2 + 2 * n_layers]
    q_ref = refs[3 + 2 * n_layers]
    dec_ref = refs[4 + 2 * n_layers]

    def matmul(a_f32, w_ref):
        w = w_ref[...]                       # already param_dtype (cast in wrapper)
        a = a_f32.astype(w.dtype) if w.dtype != a_f32.dtype else a_f32
        return jnp.dot(a, w, preferred_element_type=jnp.float32)

    h = x_ref[...].astype(jnp.float32)
    encoded = None
    for l in range(n_layers):
        y = matmul(h, wb_refs[2 * l]) + wb_refs[2 * l + 1][...]
        if l == n_enc - 1:            # encoder bottleneck: no activation
            h = y
            encoded = h
        elif l == n_layers - 1:       # final decoder layer: Sigmoid
            h = jax.nn.sigmoid(y)
        else:                         # hidden layers: ReLU (f32 VPU)
            h = jnp.maximum(y, 0.0)
    dec_ref[...] = h.astype(dec_ref.dtype)

    # Student-t clustering layer (exponent 2/(2-1) == 2):
    #   q_ij = (1 / (1 + ||z_i - c_j||^2))^2 ; q normalized over j
    z = encoded                                          # (tile_n, E_p) f32
    ct = ct_ref[...]                                     # (E_p, K_p) param_dtype
    z_mm = z.astype(ct.dtype) if ct.dtype != z.dtype else z
    cross = jnp.dot(z_mm, ct, preferred_element_type=jnp.float32)
    z2 = jnp.sum(z * z, axis=1, keepdims=True)           # (tile_n, 1) f32
    d = jnp.maximum(z2 + c2_ref[...] - 2.0 * cross, 0.0)  # clamp cancellation
    if approx_recip:
        q = pl.reciprocal(1.0 + d, approx=True)          # EUP, frees VALU slots
        q = q * q
        q = q * pl.reciprocal(jnp.sum(q, axis=1, keepdims=True), approx=True)
    else:
        q = 1.0 / (1.0 + d)
        q = q * q
        q = q / jnp.sum(q, axis=1, keepdims=True)
    q_ref[...] = q.astype(q_ref.dtype)


# ----------------------------------------------------------------------------
# Wrapper: pad to lane-dense shapes, tile the batch, one pallas_call total
# ----------------------------------------------------------------------------
def dec_forward(x, encoder, decoder, clusters, *, tile_n=512,
                param_dtype=jnp.bfloat16, approx_recip=None):
    if approx_recip is None:
        approx_recip = (param_dtype != jnp.float32)

    n, d_in = x.shape
    n_enc, n_dec = len(encoder), len(decoder)
    layers = list(encoder) + list(decoder)
    k, e = clusters.shape

    d_in_p = _round_up(d_in, 128)
    k_p = _round_up(k, 128)
    e_p = _round_up(e, 128)
    tile_n = _pick_tile_n(n, tile_n)
    n_p = _round_up(n, tile_n)

    # Zero-pad input (rows and feature columns); activations stay f32.
    x_p = jnp.zeros((n_p, d_in_p), jnp.float32).at[:n, :d_in].set(x)

    # Pad weights/biases to 128-multiples; cast weights ONCE to param_dtype.
    padded = []
    for w, b in layers:
        din, dout = w.shape
        din_p = _round_up(din, 128)
        dout_p = _round_up(dout, 128)
        w_p = (jnp.zeros((din_p, dout_p), jnp.float32).at[:din, :dout].set(w)
               ).astype(param_dtype)
        b_p = jnp.zeros((1, dout_p), jnp.float32).at[0, :dout].set(b)
        padded.append((w_p, b_p))

    # Clusters: pre-transposed to (E, K) and cast once; squared norms c2
    # precomputed in f32 with padded entries = 1e30 (so padded q underflows
    # to 0 with no in-kernel mask).
    ct_p = (jnp.zeros((e_p, k_p), jnp.float32).at[:e, :k].set(clusters.T)
            ).astype(param_dtype)
    c2_p = jnp.full((1, k_p), 1e30, jnp.float32).at[0, :k].set(
        jnp.sum(clusters.astype(jnp.float32) ** 2, axis=1))

    grid = (n_p // tile_n,)

    flat_inputs = [x_p]
    for w_p, b_p in padded:
        flat_inputs += [w_p, b_p]
    flat_inputs += [ct_p, c2_p]

    out_shape = (
        jax.ShapeDtypeStruct((n_p, k_p), jnp.float32),
        jax.ShapeDtypeStruct((n_p, d_in_p), jnp.float32),
    )
    out_specs = (
        pl.BlockSpec((tile_n, k_p), lambda i: (i, 0)),
        pl.BlockSpec((tile_n, d_in_p), lambda i: (i, 0)),
    )

    # ---- VMEM budget from actual live buffers (capped under v7x's 64 MiB).
    p_item = jnp.dtype(param_dtype).itemsize
    param_bytes = (sum(w.size * p_item + b.size * 4 for w, b in padded)
                   + ct_p.size * p_item + c2_p.size * 4)
    max_feat = max([d_in_p, k_p, e_p] + [wp.shape[1] for wp, _ in padded])
    io_bytes = 2 * (tile_n * d_in_p * 4          # x tile (double-buffered)
                    + tile_n * k_p * 4           # q tile
                    + tile_n * d_in_p * 4)       # dec tile
    act_bytes = 6 * tile_n * max_feat * 4        # live in-kernel activations
    vmem_limit = int(min(48 * 1024 * 1024,
                         max(16 * 1024 * 1024,
                             2 * param_bytes + io_bytes + act_bytes
                             + (4 << 20))))

    # ---- Cost estimate so XLA schedules pad/slice ops around the fused call.
    flops = sum(2 * n_p * w.shape[0] * w.shape[1] for w, _ in padded)
    flops += 2 * n_p * e_p * k_p + 8 * n_p * k_p
    bytes_accessed = int(x_p.size * 4 + n_p * k_p * 4 + n_p * d_in_p * 4
                         + param_bytes)
    cost = pl.CostEstimate(flops=int(flops),
                           transcendentals=int(n_p * d_in_p + 2 * n_p * k_p),
                           bytes_accessed=bytes_accessed)

    kernel = functools.partial(_dec_fused_kernel, n_enc=n_enc, n_dec=n_dec,
                               approx_recip=approx_recip)

    def _call(single_buffer_params):
        def param_spec(shape):
            if single_buffer_params:
                # Constant index_map -> no need to double-buffer the params.
                return pl.BlockSpec(shape, lambda i: (0, 0),
                                    pipeline_mode=pl.Buffered(1))
            return pl.BlockSpec(shape, lambda i: (0, 0))

        in_specs = [pl.BlockSpec((tile_n, d_in_p), lambda i: (i, 0))]
        for w_p, b_p in padded:
            in_specs.append(param_spec(w_p.shape))
            in_specs.append(param_spec(b_p.shape))
        in_specs.append(param_spec(ct_p.shape))
        in_specs.append(param_spec(c2_p.shape))

        return pl.pallas_call(
            kernel,
            grid=grid,
            in_specs=in_specs,
            out_specs=out_specs,
            out_shape=out_shape,
            compiler_params=pltpu.CompilerParams(
                dimension_semantics=("parallel",),
                vmem_limit_bytes=vmem_limit),
            cost_estimate=cost,
        )(*flat_inputs)

    try:
        q_p, dec_p = _call(True)
    except Exception:
        # Fallback if this Pallas build rejects Buffered(1) on resident params.
        q_p, dec_p = _call(False)

    # Strip padding.
    return q_p[:n, :k], dec_p[:n, :d_in]


# ----------------------------------------------------------------------------
# Parameter init (deterministic, mimics shapes of the PyTorch module)
# ----------------------------------------------------------------------------
def init_linear(key, din, dout):
    kw, kb = jax.random.split(key)
    bound = 1.0 / jnp.sqrt(din)
    w = jax.random.uniform(kw, (din, dout), jnp.float32, -bound, bound)
    b = jax.random.uniform(kb, (dout,), jnp.float32, -bound, bound)
    return w, b


def init_dec_params(key, input_dim, hidden_dims, n_clusters):
    enc_dims = [input_dim] + hidden_dims
    dec_dims = hidden_dims[::-1] + [input_dim]
    keys = jax.random.split(key, len(enc_dims) - 1 + len(dec_dims) - 1 + 1)
    ki = iter(keys)
    encoder = [init_linear(next(ki), enc_dims[i], enc_dims[i + 1])
               for i in range(len(enc_dims) - 1)]
    decoder = [init_linear(next(ki), dec_dims[i], dec_dims[i + 1])
               for i in range(len(dec_dims) - 1)]
    # xavier_normal_ for clusters: std = sqrt(2 / (fan_in + fan_out))
    std = jnp.sqrt(2.0 / (n_clusters + hidden_dims[-1]))
    clusters = std * jax.random.normal(next(ki), (n_clusters, hidden_dims[-1]),
                                       jnp.float32)
    return encoder, decoder, clusters


# ----------------------------------------------------------------------------
# Pure-JAX reference for the sanity check
# ----------------------------------------------------------------------------
def dec_reference(x, encoder, decoder, clusters):
    h = x
    for i, (w, b) in enumerate(encoder):
        h = h @ w + b
        if i < len(encoder) - 1:
            h = jnp.maximum(h, 0.0)
    encoded = h
    h = encoded
    for i, (w, b) in enumerate(decoder):
        h = h @ w + b
        h = jnp.maximum(h, 0.0) if i < len(decoder) - 1 else jax.nn.sigmoid(h)
    decoded = h
    d = jnp.sum((encoded[:, None, :] - clusters[None, :, :]) ** 2, axis=2)
    q = 1.0 / (1.0 + d)
    q = q ** 2.0
    q = q / jnp.sum(q, axis=1, keepdims=True)
    return q, decoded


if __name__ == "__main__":
    # Small shapes consistent with the module's forward (scaled-down
    # hidden_dims = [500, 500, 200, 10] -> [64, 64, 32, 16]).
    batch = 8
    input_dim = 32
    hidden_dims = [64, 64, 32, 16]
    n_clusters = 5

    key = jax.random.PRNGKey(0)
    kx, kp = jax.random.split(key)
    x = jax.random.normal(kx, (batch, input_dim), jnp.float32)
    encoder, decoder, clusters = init_dec_params(kp, input_dim, hidden_dims,
                                                 n_clusters)

    q_ref, d_ref = dec_reference(x, encoder, decoder, clusters)

    # Exact f32 path (strict self-check).
    q, decoded = dec_forward(x, encoder, decoder, clusters,
                             param_dtype=jnp.float32)
    q, decoded = jax.block_until_ready((q, decoded))
    assert q.shape == (batch, n_clusters)
    assert decoded.shape == (batch, input_dim)
    assert jnp.allclose(q, q_ref, atol=1e-5, rtol=1e-5)
    assert jnp.allclose(decoded, d_ref, atol=1e-5, rtol=1e-5)

    # Production path: bf16 weights on the MXU + approx EUP reciprocals
    # (looser tolerance by construction).
    q_bf, dec_bf = dec_forward(x, encoder, decoder, clusters,
                               param_dtype=jnp.bfloat16)
    q_bf, dec_bf = jax.block_until_ready((q_bf, dec_bf))
    assert jnp.allclose(q_bf, q_ref, atol=5e-2, rtol=5e-2)
    assert jnp.allclose(dec_bf, d_ref, atol=5e-2, rtol=5e-2)

    print("KERNEL_OK")
</pallas_src>

<mosaic_0001>
module attributes {stable_mosaic.version = 11 : i64} {
  func.func @_dec_fused_kernel(%arg0: i32, %arg1: memref<8x128xf32, #tpu.memory_space<vmem>>, %arg2: memref<128x128xf32, #tpu.memory_space<vmem>>, %arg3: memref<1x128xf32, #tpu.memory_space<vmem>>, %arg4: memref<128x128xf32, #tpu.memory_space<vmem>>, %arg5: memref<1x128xf32, #tpu.memory_space<vmem>>, %arg6: memref<128x128xf32, #tpu.memory_space<vmem>>, %arg7: memref<1x128xf32, #tpu.memory_space<vmem>>, %arg8: memref<128x128xf32, #tpu.memory_space<vmem>>, %arg9: memref<1x128xf32, #tpu.memory_space<vmem>>, %arg10: memref<128x128xf32, #tpu.memory_space<vmem>>, %arg11: memref<1x128xf32, #tpu.memory_space<vmem>>, %arg12: memref<128x128xf32, #tpu.memory_space<vmem>>, %arg13: memref<1x128xf32, #tpu.memory_space<vmem>>, %arg14: memref<128x128xf32, #tpu.memory_space<vmem>>, %arg15: memref<1x128xf32, #tpu.memory_space<vmem>>, %arg16: memref<128x128xf32, #tpu.memory_space<vmem>>, %arg17: memref<1x128xf32, #tpu.memory_space<vmem>>, %arg18: memref<128x128xf32, #tpu.memory_space<vmem>>, %arg19: memref<1x128xf32, #tpu.memory_space<vmem>>, %arg20: memref<8x128xf32, #tpu.memory_space<vmem>>, %arg21: memref<8x128xf32, #tpu.memory_space<vmem>>) attributes {dimension_semantics = [#tpu.dimension_semantics<parallel>], iteration_bounds = array<i64: 1>, scalar_prefetch = 0 : i64, scratch_operands = 0 : i64, tpu.core_type = #tpu.core_type<tc>, window_params = [{transform_indices = @transform_0, window_bounds = array<i64: 8, 128>}, {pipeline_mode = #tpu.pipeline_mode<synchronous>, transform_indices = @transform_1, window_bounds = array<i64: 128, 128>}, {pipeline_mode = #tpu.pipeline_mode<synchronous>, transform_indices = @transform_2, window_bounds = array<i64: 1, 128>}, {pipeline_mode = #tpu.pipeline_mode<synchronous>, transform_indices = @transform_3, window_bounds = array<i64: 128, 128>}, {pipeline_mode = #tpu.pipeline_mode<synchronous>, transform_indices = @transform_4, window_bounds = array<i64: 1, 128>}, {pipeline_mode = #tpu.pipeline_mode<synchronous>, transform_indices = @transform_5, window_bounds = array<i64: 128, 128>}, {pipeline_mode = #tpu.pipeline_mode<synchronous>, transform_indices = @transform_6, window_bounds = array<i64: 1, 128>}, {pipeline_mode = #tpu.pipeline_mode<synchronous>, transform_indices = @transform_7, window_bounds = array<i64: 128, 128>}, {pipeline_mode = #tpu.pipeline_mode<synchronous>, transform_indices = @transform_8, window_bounds = array<i64: 1, 128>}, {pipeline_mode = #tpu.pipeline_mode<synchronous>, transform_indices = @transform_9, window_bounds = array<i64: 128, 128>}, {pipeline_mode = #tpu.pipeline_mode<synchronous>, transform_indices = @transform_10, window_bounds = array<i64: 1, 128>}, {pipeline_mode = #tpu.pipeline_mode<synchronous>, transform_indices = @transform_11, window_bounds = array<i64: 128, 128>}, {pipeline_mode = #tpu.pipeline_mode<synchronous>, transform_indices = @transform_12, window_bounds = array<i64: 1, 128>}, {pipeline_mode = #tpu.pipeline_mode<synchronous>, transform_indices = @transform_13, window_bounds = array<i64: 128, 128>}, {pipeline_mode = #tpu.pipeline_mode<synchronous>, transform_indices = @transform_14, window_bounds = array<i64: 1, 128>}, {pipeline_mode = #tpu.pipeline_mode<synchronous>, transform_indices = @transform_15, window_bounds = array<i64: 128, 128>}, {pipeline_mode = #tpu.pipeline_mode<synchronous>, transform_indices = @transform_16, window_bounds = array<i64: 1, 128>}, {pipeline_mode = #tpu.pipeline_mode<synchronous>, transform_indices = @transform_17, window_bounds = array<i64: 128, 128>}, {pipeline_mode = #tpu.pipeline_mode<synchronous>, transform_indices = @transform_18, window_bounds = array<i64: 1, 128>}, {transform_indices = @transform_19, window_bounds = array<i64: 8, 128>}, {transform_indices = @transform_20, window_bounds = array<i64: 8, 128>}]} {
    %c0 = arith.constant 0 : index
    %c0_0 = arith.constant 0 : index
    %0 = vector.load %arg1[%c0, %c0_0] : memref<8x128xf32, #tpu.memory_space<vmem>>, vector<8x128xf32>
    %c0_1 = arith.constant 0 : index
    %c0_2 = arith.constant 0 : index
    %1 = vector.load %arg2[%c0_1, %c0_2] : memref<128x128xf32, #tpu.memory_space<vmem>>, vector<128x128xf32>
    %cst = arith.constant dense<0.000000e+00> : vector<8x128xf32>
    %2 = tpu.matmul %0, %1, %cst {dimension_numbers = #tpu.dot_dimension_numbers<[1], [0], [0], [1], [0, 0, 1, 1], [], []>} : vector<8x128xf32>, vector<128x128xf32>, vector<8x128xf32> -> vector<8x128xf32>
    %c0_3 = arith.constant 0 : index
    %c0_4 = arith.constant 0 : index
    %3 = vector.load %arg3[%c0_3, %c0_4] : memref<1x128xf32, #tpu.memory_space<vmem>>, vector<1x128xf32>
    %4 = vector.broadcast %3 : vector<1x128xf32> to vector<8x128xf32>
    %5 = arith.addf %2, %4 : vector<8x128xf32>
    %cst_5 = arith.constant 0.000000e+00 : f32
    %6 = vector.broadcast %cst_5 : f32 to vector<8x128xf32>
    %7 = arith.maximumf %5, %6 : vector<8x128xf32>
    %c0_6 = arith.constant 0 : index
    %c0_7 = arith.constant 0 : index
    %8 = vector.load %arg4[%c0_6, %c0_7] : memref<128x128xf32, #tpu.memory_space<vmem>>, vector<128x128xf32>
    %cst_8 = arith.constant dense<0.000000e+00> : vector<8x128xf32>
    %9 = tpu.matmul %7, %8, %cst_8 {dimension_numbers = #tpu.dot_dimension_numbers<[1], [0], [0], [1], [0, 0, 1, 1], [], []>} : vector<8x128xf32>, vector<128x128xf32>, vector<8x128xf32> -> vector<8x128xf32>
    %c0_9 = arith.constant 0 : index
    %c0_10 = arith.constant 0 : index
    %10 = vector.load %arg5[%c0_9, %c0_10] : memref<1x128xf32, #tpu.memory_space<vmem>>, vector<1x128xf32>
    %11 = vector.broadcast %10 : vector<1x128xf32> to vector<8x128xf32>
    %12 = arith.addf %9, %11 : vector<8x128xf32>
    %cst_11 = arith.constant 0.000000e+00 : f32
    %13 = vector.broadcast %cst_11 : f32 to vector<8x128xf32>
    %14 = arith.maximumf %12, %13 : vector<8x128xf32>
    %c0_12 = arith.constant 0 : index
    %c0_13 = arith.constant 0 : index
    %15 = vector.load %arg6[%c0_12, %c0_13] : memref<128x128xf32, #tpu.memory_space<vmem>>, vector<128x128xf32>
    %cst_14 = arith.constant dense<0.000000e+00> : vector<8x128xf32>
    %16 = tpu.matmul %14, %15, %cst_14 {dimension_numbers = #tpu.dot_dimension_numbers<[1], [0], [0], [1], [0, 0, 1, 1], [], []>} : vector<8x128xf32>, vector<128x128xf32>, vector<8x128xf32> -> vector<8x128xf32>
    %c0_15 = arith.constant 0 : index
    %c0_16 = arith.constant 0 : index
    %17 = vector.load %arg7[%c0_15, %c0_16] : memref<1x128xf32, #tpu.memory_space<vmem>>, vector<1x128xf32>
    %18 = vector.broadcast %17 : vector<1x128xf32> to vector<8x128xf32>
    %19 = arith.addf %16, %18 : vector<8x128xf32>
    %cst_17 = arith.constant 0.000000e+00 : f32
    %20 = vector.broadcast %cst_17 : f32 to vector<8x128xf32>
    %21 = arith.maximumf %19, %20 : vector<8x128xf32>
    %c0_18 = arith.constant 0 : index
    %c0_19 = arith.constant 0 : index
    %22 = vector.load %arg8[%c0_18, %c0_19] : memref<128x128xf32, #tpu.memory_space<vmem>>, vector<128x128xf32>
    %cst_20 = arith.constant dense<0.000000e+00> : vector<8x128xf32>
    %23 = tpu.matmul %21, %22, %cst_20 {dimension_numbers = #tpu.dot_dimension_numbers<[1], [0], [0], [1], [0, 0, 1, 1], [], []>} : vector<8x128xf32>, vector<128x128xf32>, vector<8x128xf32> -> vector<8x128xf32>
    %c0_21 = arith.constant 0 : index
    %c0_22 = arith.constant 0 : index
    %24 = vector.load %arg9[%c0_21, %c0_22] : memref<1x128xf32, #tpu.memory_space<vmem>>, vector<1x128xf32>
    %25 = vector.broadcast %24 : vector<1x128xf32> to vector<8x128xf32>
    %26 = arith.addf %23, %25 : vector<8x128xf32>
    %c0_23 = arith.constant 0 : index
    %c0_24 = arith.constant 0 : index
    %27 = vector.load %arg10[%c0_23, %c0_24] : memref<128x128xf32, #tpu.memory_space<vmem>>, vector<128x128xf32>
    %cst_25 = arith.constant dense<0.000000e+00> : vector<8x128xf32>
    %28 = tpu.matmul %26, %27, %cst_25 {dimension_numbers = #tpu.dot_dimension_numbers<[1], [0], [0], [1], [0, 0, 1, 1], [], []>} : vector<8x128xf32>, vector<128x128xf32>, vector<8x128xf32> -> vector<8x128xf32>
    %c0_26 = arith.constant 0 : index
    %c0_27 = arith.constant 0 : index
    %29 = vector.load %arg11[%c0_26, %c0_27] : memref<1x128xf32, #tpu.memory_space<vmem>>, vector<1x128xf32>
    %30 = vector.broadcast %29 : vector<1x128xf32> to vector<8x128xf32>
    %31 = arith.addf %28, %30 : vector<8x128xf32>
    %cst_28 = arith.constant 0.000000e+00 : f32
    %32 = vector.broadcast %cst_28 : f32 to vector<8x128xf32>
    %33 = arith.maximumf %31, %32 : vector<8x128xf32>
    %c0_29 = arith.constant 0 : index
    %c0_30 = arith.constant 0 : index
    %34 = vector.load %arg12[%c0_29, %c0_30] : memref<128x128xf32, #tpu.memory_space<vmem>>, vector<128x128xf32>
    %cst_31 = arith.constant dense<0.000000e+00> : vector<8x128xf32>
    %35 = tpu.matmul %33, %34, %cst_31 {dimension_numbers = #tpu.dot_dimension_numbers<[1], [0], [0], [1], [0, 0, 1, 1], [], []>} : vector<8x128xf32>, vector<128x128xf32>, vector<8x128xf32> -> vector<8x128xf32>
    %c0_32 = arith.constant 0 : index
    %c0_33 = arith.constant 0 : index
    %36 = vector.load %arg13[%c0_32, %c0_33] : memref<1x128xf32, #tpu.memory_space<vmem>>, vector<1x128xf32>
    %37 = vector.broadcast %36 : vector<1x128xf32> to vector<8x128xf32>
    %38 = arith.addf %35, %37 : vector<8x128xf32>
    %cst_34 = arith.constant 0.000000e+00 : f32
    %39 = vector.broadcast %cst_34 : f32 to vector<8x128xf32>
    %40 = arith.maximumf %38, %39 : vector<8x128xf32>
    %c0_35 = arith.constant 0 : index
    %c0_36 = arith.constant 0 : index
    %41 = vector.load %arg14[%c0_35, %c0_36] : memref<128x128xf32, #tpu.memory_space<vmem>>, vector<128x128xf32>
    %cst_37 = arith.constant dense<0.000000e+00> : vector<8x128xf32>
    %42 = tpu.matmul %40, %41, %cst_37 {dimension_numbers = #tpu.dot_dimension_numbers<[1], [0], [0], [1], [0, 0, 1, 1], [], []>} : vector<8x128xf32>, vector<128x128xf32>, vector<8x128xf32> -> vector<8x128xf32>
    %c0_38 = arith.constant 0 : index
    %c0_39 = arith.constant 0 : index
    %43 = vector.load %arg15[%c0_38, %c0_39] : memref<1x128xf32, #tpu.memory_space<vmem>>, vector<1x128xf32>
    %44 = vector.broadcast %43 : vector<1x128xf32> to vector<8x128xf32>
    %45 = arith.addf %42, %44 : vector<8x128xf32>
    %cst_40 = arith.constant 0.000000e+00 : f32
    %46 = vector.broadcast %cst_40 : f32 to vector<8x128xf32>
    %47 = arith.maximumf %45, %46 : vector<8x128xf32>
    %c0_41 = arith.constant 0 : index
    %c0_42 = arith.constant 0 : index
    %48 = vector.load %arg16[%c0_41, %c0_42] : memref<128x128xf32, #tpu.memory_space<vmem>>, vector<128x128xf32>
    %cst_43 = arith.constant dense<0.000000e+00> : vector<8x128xf32>
    %49 = tpu.matmul %47, %48, %cst_43 {dimension_numbers = #tpu.dot_dimension_numbers<[1], [0], [0], [1], [0, 0, 1, 1], [], []>} : vector<8x128xf32>, vector<128x128xf32>, vector<8x128xf32> -> vector<8x128xf32>
    %c0_44 = arith.constant 0 : index
    %c0_45 = arith.constant 0 : index
    %50 = vector.load %arg17[%c0_44, %c0_45] : memref<1x128xf32, #tpu.memory_space<vmem>>, vector<1x128xf32>
    %51 = vector.broadcast %50 : vector<1x128xf32> to vector<8x128xf32>
    %52 = arith.addf %49, %51 : vector<8x128xf32>
    %53 = arith.negf %52 : vector<8x128xf32>
    %54 = math.exp %53 : vector<8x128xf32>
    %cst_46 = arith.constant 1.000000e+00 : f32
    %55 = vector.broadcast %cst_46 : f32 to vector<8x128xf32>
    %56 = arith.addf %55, %54 : vector<8x128xf32>
    %57 = arith.divf %55, %56 : vector<8x128xf32>
    %c0_47 = arith.constant 0 : index
    %c0_48 = arith.constant 0 : index
    %58 = vector.load %arg21[%c0_47, %c0_48] : memref<8x128xf32, #tpu.memory_space<vmem>>, vector<8x128xf32>
    tpu.vector_store %arg21[%c0_47, %c0_48], %57 {strides = array<i32>} : memref<8x128xf32, #tpu.memory_space<vmem>>, vector<8x128xf32>,
    %c0_49 = arith.constant 0 : index
    %c0_50 = arith.constant 0 : index
    %59 = vector.load %arg18[%c0_49, %c0_50] : memref<128x128xf32, #tpu.memory_space<vmem>>, vector<128x128xf32>
    %cst_51 = arith.constant dense<0.000000e+00> : vector<8x128xf32>
    %60 = tpu.matmul %26, %59, %cst_51 {dimension_numbers = #tpu.dot_dimension_numbers<[1], [0], [0], [1], [0, 0, 1, 1], [], []>} : vector<8x128xf32>, vector<128x128xf32>, vector<8x128xf32> -> vector<8x128xf32>
    %61 = arith.mulf %26, %26 : vector<8x128xf32>
    %cst_52 = arith.constant dense<0.000000e+00> : vector<8xf32>
    %62 = vector.multi_reduction <add>, %61, %cst_52 [1] : vector<8x128xf32> to vector<8xf32>
    %63 = vector.shape_cast %62 : vector<8xf32> to vector<8x1xf32>
    %c0_53 = arith.constant 0 : index
    %c0_54 = arith.constant 0 : index
    %64 = vector.load %arg19[%c0_53, %c0_54] : memref<1x128xf32, #tpu.memory_space<vmem>>, vector<1x128xf32>
    %65 = vector.broadcast %63 : vector<8x1xf32> to vector<8x128xf32>
    %66 = vector.broadcast %64 : vector<1x128xf32> to vector<8x128xf32>
    %67 = arith.addf %65, %66 : vector<8x128xf32>
    %cst_55 = arith.constant 2.000000e+00 : f32
    %68 = vector.broadcast %cst_55 : f32 to vector<8x128xf32>
    %69 = arith.mulf %68, %60 : vector<8x128xf32>
    %70 = arith.subf %67, %69 : vector<8x128xf32>
    %cst_56 = arith.constant 0.000000e+00 : f32
    %71 = vector.broadcast %cst_56 : f32 to vector<8x128xf32>
    %72 = arith.maximumf %70, %71 : vector<8x128xf32>
    %cst_57 = arith.constant 1.000000e+00 : f32
    %73 = vector.broadcast %cst_57 : f32 to vector<8x128xf32>
    %74 = arith.addf %73, %72 : vector<8x128xf32>
    %cst_58 = arith.constant 1.000000e+00 : f32
    %75 = vector.broadcast %cst_58 : f32 to vector<8x128xf32>
    %76 = arith.divf %75, %74 : vector<8x128xf32>
    %77 = arith.mulf %76, %76 : vector<8x128xf32>
    %cst_59 = arith.constant dense<0.000000e+00> : vector<8xf32>
    %78 = vector.multi_reduction <add>, %77, %cst_59 [1] : vector<8x128xf32> to vector<8xf32>
    %79 = vector.shape_cast %78 : vector<8xf32> to vector<8x1xf32>
    %80 = vector.broadcast %79 : vector<8x1xf32> to vector<8x128xf32>
    %81 = arith.divf %77, %80 : vector<8x128xf32>
    %c0_60 = arith.constant 0 : index
    %c0_61 = arith.constant 0 : index
    %82 = vector.load %arg20[%c0_60, %c0_61] : memref<8x128xf32, #tpu.memory_space<vmem>>, vector<8x128xf32>
    tpu.vector_store %arg20[%c0_60, %c0_61], %81 {strides = array<i32>} : memref<8x128xf32, #tpu.memory_space<vmem>>, vector<8x128xf32>,
    return
  }
  func.func @transform_0(%arg0: i32) -> (i32, i32) {
    %c0_i32 = arith.constant 0 : i32
    %c0_i32_0 = arith.constant 0 : i32
    return %arg0, %c0_i32 : i32, i32
  }
  func.func @transform_1(%arg0: i32) -> (i32, i32) {
    %c0_i32 = arith.constant 0 : i32
    %c0_i32_0 = arith.constant 0 : i32
    %c0_i32_1 = arith.constant 0 : i32
    return %c0_i32, %c0_i32_0 : i32, i32
  }
  func.func @transform_2(%arg0: i32) -> (i32, i32) {
    %c0_i32 = arith.constant 0 : i32
    %c0_i32_0 = arith.constant 0 : i32
    %c0_i32_1 = arith.constant 0 : i32
    return %c0_i32, %c0_i32_0 : i32, i32
  }
  func.func @transform_3(%arg0: i32) -> (i32, i32) {
    %c0_i32 = arith.constant 0 : i32
    %c0_i32_0 = arith.constant 0 : i32
    %c0_i32_1 = arith.constant 0 : i32
    return %c0_i32, %c0_i32_0 : i32, i32
  }
  func.func @transform_4(%arg0: i32) -> (i32, i32) {
    %c0_i32 = arith.constant 0 : i32
    %c0_i32_0 = arith.constant 0 : i32
    %c0_i32_1 = arith.constant 0 : i32
    return %c0_i32, %c0_i32_0 : i32, i32
  }
  func.func @transform_5(%arg0: i32) -> (i32, i32) {
    %c0_i32 = arith.constant 0 : i32
    %c0_i32_0 = arith.constant 0 : i32
    %c0_i32_1 = arith.constant 0 : i32
    return %c0_i32, %c0_i32_0 : i32, i32
  }
  func.func @transform_6(%arg0: i32) -> (i32, i32) {
    %c0_i32 = arith.constant 0 : i32
    %c0_i32_0 = arith.constant 0 : i32
    %c0_i32_1 = arith.constant 0 : i32
    return %c0_i32, %c0_i32_0 : i32, i32
  }
  func.func @transform_7(%arg0: i32) -> (i32, i32) {
    %c0_i32 = arith.constant 0 : i32
    %c0_i32_0 = arith.constant 0 : i32
    %c0_i32_1 = arith.constant 0 : i32
    return %c0_i32, %c0_i32_0 : i32, i32
  }
  func.func @transform_8(%arg0: i32) -> (i32, i32) {
    %c0_i32 = arith.constant 0 : i32
    %c0_i32_0 = arith.constant 0 : i32
    %c0_i32_1 = arith.constant 0 : i32
    return %c0_i32, %c0_i32_0 : i32, i32
  }
  func.func @transform_9(%arg0: i32) -> (i32, i32) {
    %c0_i32 = arith.constant 0 : i32
    %c0_i32_0 = arith.constant 0 : i32
    %c0_i32_1 = arith.constant 0 : i32
    return %c0_i32, %c0_i32_0 : i32, i32
  }
  func.func @transform_10(%arg0: i32) -> (i32, i32) {
    %c0_i32 = arith.constant 0 : i32
    %c0_i32_0 = arith.constant 0 : i32
    %c0_i32_1 = arith.constant 0 : i32
    return %c0_i32, %c0_i32_0 : i32, i32
  }
  func.func @transform_11(%arg0: i32) -> (i32, i32) {
    %c0_i32 = arith.constant 0 : i32
    %c0_i32_0 = arith.constant 0 : i32
    %c0_i32_1 = arith.constant 0 : i32
    return %c0_i32, %c0_i32_0 : i32, i32
  }
  func.func @transform_12(%arg0: i32) -> (i32, i32) {
    %c0_i32 = arith.constant 0 : i32
    %c0_i32_0 = arith.constant 0 : i32
    %c0_i32_1 = arith.constant 0 : i32
    return %c0_i32, %c0_i32_0 : i32, i32
  }
  func.func @transform_13(%arg0: i32) -> (i32, i32) {
    %c0_i32 = arith.constant 0 : i32
    %c0_i32_0 = arith.constant 0 : i32
    %c0_i32_1 = arith.constant 0 : i32
    return %c0_i32, %c0_i32_0 : i32, i32
  }
  func.func @transform_14(%arg0: i32) -> (i32, i32) {
    %c0_i32 = arith.constant 0 : i32
    %c0_i32_0 = arith.constant 0 : i32
    %c0_i32_1 = arith.constant 0 : i32
    return %c0_i32, %c0_i32_0 : i32, i32
  }
  func.func @transform_15(%arg0: i32) -> (i32, i32) {
    %c0_i32 = arith.constant 0 : i32
    %c0_i32_0 = arith.constant 0 : i32
    %c0_i32_1 = arith.constant 0 : i32
    return %c0_i32, %c0_i32_0 : i32, i32
  }
  func.func @transform_16(%arg0: i32) -> (i32, i32) {
    %c0_i32 = arith.constant 0 : i32
    %c0_i32_0 = arith.constant 0 : i32
    %c0_i32_1 = arith.constant 0 : i32
    return %c0_i32, %c0_i32_0 : i32, i32
  }
  func.func @transform_17(%arg0: i32) -> (i32, i32) {
    %c0_i32 = arith.constant 0 : i32
    %c0_i32_0 = arith.constant 0 : i32
    %c0_i32_1 = arith.constant 0 : i32
    return %c0_i32, %c0_i32_0 : i32, i32
  }
  func.func @transform_18(%arg0: i32) -> (i32, i32) {
    %c0_i32 = arith.constant 0 : i32
    %c0_i32_0 = arith.constant 0 : i32
    %c0_i32_1 = arith.constant 0 : i32
    return %c0_i32, %c0_i32_0 : i32, i32
  }
  func.func @transform_19(%arg0: i32) -> (i32, i32) {
    %c0_i32 = arith.constant 0 : i32
    %c0_i32_0 = arith.constant 0 : i32
    return %arg0, %c0_i32 : i32, i32
  }
  func.func @transform_20(%arg0: i32) -> (i32, i32) {
    %c0_i32 = arith.constant 0 : i32
    %c0_i32_0 = arith.constant 0 : i32
    return %arg0, %c0_i32 : i32, i32
  }
}

module attributes {stable_mosaic.version = 11 : i64} {
  func.func @_dec_fused_kernel(%arg0: i32, %arg1: memref<8x128xf32, #tpu.memory_space<vmem>>, %arg2: memref<128x128xf32, #tpu.memory_space<vmem>>, %arg3: memref<1x128xf32, #tpu.memory_space<vmem>>, %arg4: memref<128x128xf32, #tpu.memory_space<vmem>>, %arg5: memref<1x128xf32, #tpu.memory_space<vmem>>, %arg6: memref<128x128xf32, #tpu.memory_space<vmem>>, %arg7: memref<1x128xf32, #tpu.memory_space<vmem>>, %arg8: memref<128x128xf32, #tpu.memory_space<vmem>>, %arg9: memref<1x128xf32, #tpu.memory_space<vmem>>, %arg10: memref<128x128xf32, #tpu.memory_space<vmem>>, %arg11: memref<1x128xf32, #tpu.memory_space<vmem>>, %arg12: memref<128x128xf32, #tpu.memory_space<vmem>>, %arg13: memref<1x128xf32, #tpu.memory_space<vmem>>, %arg14: memref<128x128xf32, #tpu.memory_space<vmem>>, %arg15: memref<1x128xf32, #tpu.memory_space<vmem>>, %arg16: memref<128x128xf32, #tpu.memory_space<vmem>>, %arg17: memref<1x128xf32, #tpu.memory_space<vmem>>, %arg18: memref<128x128xf32, #tpu.memory_space<vmem>>, %arg19: memref<1x128xf32, #tpu.memory_space<vmem>>, %arg20: memref<8x128xf32, #tpu.memory_space<vmem>>, %arg21: memref<8x128xf32, #tpu.memory_space<vmem>>) attributes {dimension_semantics = [#tpu.dimension_semantics<parallel>], iteration_bounds = array<i64: 1>, scalar_prefetch = 0 : i64, scratch_operands = 0 : i64, tpu.core_type = #tpu.core_type<tc>, window_params = [{transform_indices = @transform_0, window_bounds = array<i64: 8, 128>}, {pipeline_mode = #tpu.pipeline_mode<synchronous>, transform_indices = @transform_1, window_bounds = array<i64: 128, 128>}, {pipeline_mode = #tpu.pipeline_mode<synchronous>, transform_indices = @transform_2, window_bounds = array<i64: 1, 128>}, {pipeline_mode = #tpu.pipeline_mode<synchronous>, transform_indices = @transform_3, window_bounds = array<i64: 128, 128>}, {pipeline_mode = #tpu.pipeline_mode<synchronous>, transform_indices = @transform_4, window_bounds = array<i64: 1, 128>}, {pipeline_mode = #tpu.pipeline_mode<synchronous>, transform_indices = @transform_5, window_bounds = array<i64: 128, 128>}, {pipeline_mode = #tpu.pipeline_mode<synchronous>, transform_indices = @transform_6, window_bounds = array<i64: 1, 128>}, {pipeline_mode = #tpu.pipeline_mode<synchronous>, transform_indices = @transform_7, window_bounds = array<i64: 128, 128>}, {pipeline_mode = #tpu.pipeline_mode<synchronous>, transform_indices = @transform_8, window_bounds = array<i64: 1, 128>}, {pipeline_mode = #tpu.pipeline_mode<synchronous>, transform_indices = @transform_9, window_bounds = array<i64: 128, 128>}, {pipeline_mode = #tpu.pipeline_mode<synchronous>, transform_indices = @transform_10, window_bounds = array<i64: 1, 128>}, {pipeline_mode = #tpu.pipeline_mode<synchronous>, transform_indices = @transform_11, window_bounds = array<i64: 128, 128>}, {pipeline_mode = #tpu.pipeline_mode<synchronous>, transform_indices = @transform_12, window_bounds = array<i64: 1, 128>}, {pipeline_mode = #tpu.pipeline_mode<synchronous>, transform_indices = @transform_13, window_bounds = array<i64: 128, 128>}, {pipeline_mode = #tpu.pipeline_mode<synchronous>, transform_indices = @transform_14, window_bounds = array<i64: 1, 128>}, {pipeline_mode = #tpu.pipeline_mode<synchronous>, transform_indices = @transform_15, window_bounds = array<i64: 128, 128>}, {pipeline_mode = #tpu.pipeline_mode<synchronous>, transform_indices = @transform_16, window_bounds = array<i64: 1, 128>}, {pipeline_mode = #tpu.pipeline_mode<synchronous>, transform_indices = @transform_17, window_bounds = array<i64: 128, 128>}, {pipeline_mode = #tpu.pipeline_mode<synchronous>, transform_indices = @transform_18, window_bounds = array<i64: 1, 128>}, {transform_indices = @transform_19, window_bounds = array<i64: 8, 128>}, {transform_indices = @transform_20, window_bounds = array<i64: 8, 128>}]} {
    %c0 = arith.constant 0 : index
    %c0_0 = arith.constant 0 : index
    %0 = vector.load %arg1[%c0, %c0_0] : memref<8x128xf32, #tpu.memory_space<vmem>>, vector<8x128xf32>
    %c0_1 = arith.constant 0 : index
    %c0_2 = arith.constant 0 : index
    %1 = vector.load %arg2[%c0_1, %c0_2] : memref<128x128xf32, #tpu.memory_space<vmem>>, vector<128x128xf32>
    %cst = arith.constant dense<0.000000e+00> : vector<8x128xf32>
    %2 = tpu.matmul %0, %1, %cst {dimension_numbers = #tpu.dot_dimension_numbers<[1], [0], [0], [1], [0, 0, 1, 1], [], []>} : vector<8x128xf32>, vector<128x128xf32>, vector<8x128xf32> -> vector<8x128xf32>
    %c0_3 = arith.constant 0 : index
    %c0_4 = arith.constant 0 : index
    %3 = vector.load %arg3[%c0_3, %c0_4] : memref<1x128xf32, #tpu.memory_space<vmem>>, vector<1x128xf32>
    %4 = vector.broadcast %3 : vector<1x128xf32> to vector<8x128xf32>
    %5 = arith.addf %2, %4 : vector<8x128xf32>
    %cst_5 = arith.constant 0.000000e+00 : f32
    %6 = vector.broadcast %cst_5 : f32 to vector<8x128xf32>
    %7 = arith.maximumf %5, %6 : vector<8x128xf32>
    %c0_6 = arith.constant 0 : index
    %c0_7 = arith.constant 0 : index
    %8 = vector.load %arg4[%c0_6, %c0_7] : memref<128x128xf32, #tpu.memory_space<vmem>>, vector<128x128xf32>
    %cst_8 = arith.constant dense<0.000000e+00> : vector<8x128xf32>
    %9 = tpu.matmul %7, %8, %cst_8 {dimension_numbers = #tpu.dot_dimension_numbers<[1], [0], [0], [1], [0, 0, 1, 1], [], []>} : vector<8x128xf32>, vector<128x128xf32>, vector<8x128xf32> -> vector<8x128xf32>
    %c0_9 = arith.constant 0 : index
    %c0_10 = arith.constant 0 : index
    %10 = vector.load %arg5[%c0_9, %c0_10] : memref<1x128xf32, #tpu.memory_space<vmem>>, vector<1x128xf32>
    %11 = vector.broadcast %10 : vector<1x128xf32> to vector<8x128xf32>
    %12 = arith.addf %9, %11 : vector<8x128xf32>
    %cst_11 = arith.constant 0.000000e+00 : f32
    %13 = vector.broadcast %cst_11 : f32 to vector<8x128xf32>
    %14 = arith.maximumf %12, %13 : vector<8x128xf32>
    %c0_12 = arith.constant 0 : index
    %c0_13 = arith.constant 0 : index
    %15 = vector.load %arg6[%c0_12, %c0_13] : memref<128x128xf32, #tpu.memory_space<vmem>>, vector<128x128xf32>
    %cst_14 = arith.constant dense<0.000000e+00> : vector<8x128xf32>
    %16 = tpu.matmul %14, %15, %cst_14 {dimension_numbers = #tpu.dot_dimension_numbers<[1], [0], [0], [1], [0, 0, 1, 1], [], []>} : vector<8x128xf32>, vector<128x128xf32>, vector<8x128xf32> -> vector<8x128xf32>
    %c0_15 = arith.constant 0 : index
    %c0_16 = arith.constant 0 : index
    %17 = vector.load %arg7[%c0_15, %c0_16] : memref<1x128xf32, #tpu.memory_space<vmem>>, vector<1x128xf32>
    %18 = vector.broadcast %17 : vector<1x128xf32> to vector<8x128xf32>
    %19 = arith.addf %16, %18 : vector<8x128xf32>
    %cst_17 = arith.constant 0.000000e+00 : f32
    %20 = vector.broadcast %cst_17 : f32 to vector<8x128xf32>
    %21 = arith.maximumf %19, %20 : vector<8x128xf32>
    %c0_18 = arith.constant 0 : index
    %c0_19 = arith.constant 0 : index
    %22 = vector.load %arg8[%c0_18, %c0_19] : memref<128x128xf32, #tpu.memory_space<vmem>>, vector<128x128xf32>
    %cst_20 = arith.constant dense<0.000000e+00> : vector<8x128xf32>
    %23 = tpu.matmul %21, %22, %cst_20 {dimension_numbers = #tpu.dot_dimension_numbers<[1], [0], [0], [1], [0, 0, 1, 1], [], []>} : vector<8x128xf32>, vector<128x128xf32>, vector<8x128xf32> -> vector<8x128xf32>
    %c0_21 = arith.constant 0 : index
    %c0_22 = arith.constant 0 : index
    %24 = vector.load %arg9[%c0_21, %c0_22] : memref<1x128xf32, #tpu.memory_space<vmem>>, vector<1x128xf32>
    %25 = vector.broadcast %24 : vector<1x128xf32> to vector<8x128xf32>
    %26 = arith.addf %23, %25 : vector<8x128xf32>
    %c0_23 = arith.constant 0 : index
    %c0_24 = arith.constant 0 : index
    %27 = vector.load %arg10[%c0_23, %c0_24] : memref<128x128xf32, #tpu.memory_space<vmem>>, vector<128x128xf32>
    %cst_25 = arith.constant dense<0.000000e+00> : vector<8x128xf32>
    %28 = tpu.matmul %26, %27, %cst_25 {dimension_numbers = #tpu.dot_dimension_numbers<[1], [0], [0], [1], [0, 0, 1, 1], [], []>} : vector<8x128xf32>, vector<128x128xf32>, vector<8x128xf32> -> vector<8x128xf32>
    %c0_26 = arith.constant 0 : index
    %c0_27 = arith.constant 0 : index
    %29 = vector.load %arg11[%c0_26, %c0_27] : memref<1x128xf32, #tpu.memory_space<vmem>>, vector<1x128xf32>
    %30 = vector.broadcast %29 : vector<1x128xf32> to vector<8x128xf32>
    %31 = arith.addf %28, %30 : vector<8x128xf32>
    %cst_28 = arith.constant 0.000000e+00 : f32
    %32 = vector.broadcast %cst_28 : f32 to vector<8x128xf32>
    %33 = arith.maximumf %31, %32 : vector<8x128xf32>
    %c0_29 = arith.constant 0 : index
    %c0_30 = arith.constant 0 : index
    %34 = vector.load %arg12[%c0_29, %c0_30] : memref<128x128xf32, #tpu.memory_space<vmem>>, vector<128x128xf32>
    %cst_31 = arith.constant dense<0.000000e+00> : vector<8x128xf32>
    %35 = tpu.matmul %33, %34, %cst_31 {dimension_numbers = #tpu.dot_dimension_numbers<[1], [0], [0], [1], [0, 0, 1, 1], [], []>} : vector<8x128xf32>, vector<128x128xf32>, vector<8x128xf32> -> vector<8x128xf32>
    %c0_32 = arith.constant 0 : index
    %c0_33 = arith.constant 0 : index
    %36 = vector.load %arg13[%c0_32, %c0_33] : memref<1x128xf32, #tpu.memory_space<vmem>>, vector<1x128xf32>
    %37 = vector.broadcast %36 : vector<1x128xf32> to vector<8x128xf32>
    %38 = arith.addf %35, %37 : vector<8x128xf32>
    %cst_34 = arith.constant 0.000000e+00 : f32
    %39 = vector.broadcast %cst_34 : f32 to vector<8x128xf32>
    %40 = arith.maximumf %38, %39 : vector<8x128xf32>
    %c0_35 = arith.constant 0 : index
    %c0_36 = arith.constant 0 : index
    %41 = vector.load %arg14[%c0_35, %c0_36] : memref<128x128xf32, #tpu.memory_space<vmem>>, vector<128x128xf32>
    %cst_37 = arith.constant dense<0.000000e+00> : vector<8x128xf32>
    %42 = tpu.matmul %40, %41, %cst_37 {dimension_numbers = #tpu.dot_dimension_numbers<[1], [0], [0], [1], [0, 0, 1, 1], [], []>} : vector<8x128xf32>, vector<128x128xf32>, vector<8x128xf32> -> vector<8x128xf32>
    %c0_38 = arith.constant 0 : index
    %c0_39 = arith.constant 0 : index
    %43 = vector.load %arg15[%c0_38, %c0_39] : memref<1x128xf32, #tpu.memory_space<vmem>>, vector<1x128xf32>
    %44 = vector.broadcast %43 : vector<1x128xf32> to vector<8x128xf32>
    %45 = arith.addf %42, %44 : vector<8x128xf32>
    %cst_40 = arith.constant 0.000000e+00 : f32
    %46 = vector.broadcast %cst_40 : f32 to vector<8x128xf32>
    %47 = arith.maximumf %45, %46 : vector<8x128xf32>
    %c0_41 = arith.constant 0 : index
    %c0_42 = arith.constant 0 : index
    %48 = vector.load %arg16[%c0_41, %c0_42] : memref<128x128xf32, #tpu.memory_space<vmem>>, vector<128x128xf32>
    %cst_43 = arith.constant dense<0.000000e+00> : vector<8x128xf32>
    %49 = tpu.matmul %47, %48, %cst_43 {dimension_numbers = #tpu.dot_dimension_numbers<[1], [0], [0], [1], [0, 0, 1, 1], [], []>} : vector<8x128xf32>, vector<128x128xf32>, vector<8x128xf32> -> vector<8x128xf32>
    %c0_44 = arith.constant 0 : index
    %c0_45 = arith.constant 0 : index
    %50 = vector.load %arg17[%c0_44, %c0_45] : memref<1x128xf32, #tpu.memory_space<vmem>>, vector<1x128xf32>
    %51 = vector.broadcast %50 : vector<1x128xf32> to vector<8x128xf32>
    %52 = arith.addf %49, %51 : vector<8x128xf32>
    %53 = arith.negf %52 : vector<8x128xf32>
    %54 = math.exp %53 : vector<8x128xf32>
    %cst_46 = arith.constant 1.000000e+00 : f32
    %55 = vector.broadcast %cst_46 : f32 to vector<8x128xf32>
    %56 = arith.addf %55, %54 : vector<8x128xf32>
    %57 = arith.divf %55, %56 : vector<8x128xf32>
    %c0_47 = arith.constant 0 : index
    %c0_48 = arith.constant 0 : index
    %58 = vector.load %arg21[%c0_47, %c0_48] : memref<8x128xf32, #tpu.memory_space<vmem>>, vector<8x128xf32>
    tpu.vector_store %arg21[%c0_47, %c0_48], %57 {strides = array<i32>} : memref<8x128xf32, #tpu.memory_space<vmem>>, vector<8x128xf32>,
    %c0_49 = arith.constant 0 : index
    %c0_50 = arith.constant 0 : index
    %59 = vector.load %arg18[%c0_49, %c0_50] : memref<128x128xf32, #tpu.memory_space<vmem>>, vector<128x128xf32>
    %cst_51 = arith.constant dense<0.000000e+00> : vector<8x128xf32>
    %60 = tpu.matmul %26, %59, %cst_51 {dimension_numbers = #tpu.dot_dimension_numbers<[1], [0], [0], [1], [0, 0, 1, 1], [], []>} : vector<8x128xf32>, vector<128x128xf32>, vector<8x128xf32> -> vector<8x128xf32>
    %61 = arith.mulf %26, %26 : vector<8x128xf32>
    %cst_52 = arith.constant dense<0.000000e+00> : vector<8xf32>
    %62 = vector.multi_reduction <add>, %61, %cst_52 [1] : vector<8x128xf32> to vector<8xf32>
    %63 = vector.shape_cast %62 : vector<8xf32> to vector<8x1xf32>
    %c0_53 = arith.constant 0 : index
    %c0_54 = arith.constant 0 : index
    %64 = vector.load %arg19[%c0_53, %c0_54] : memref<1x128xf32, #tpu.memory_space<vmem>>, vector<1x128xf32>
    %65 = vector.broadcast %63 : vector<8x1xf32> to vector<8x128xf32>
    %66 = vector.broadcast %64 : vector<1x128xf32> to vector<8x128xf32>
    %67 = arith.addf %65, %66 : vector<8x128xf32>
    %cst_55 = arith.constant 2.000000e+00 : f32
    %68 = vector.broadcast %cst_55 : f32 to vector<8x128xf32>
    %69 = arith.mulf %68, %60 : vector<8x128xf32>
    %70 = arith.subf %67, %69 : vector<8x128xf32>
    %cst_56 = arith.constant 0.000000e+00 : f32
    %71 = vector.broadcast %cst_56 : f32 to vector<8x128xf32>
    %72 = arith.maximumf %70, %71 : vector<8x128xf32>
    %cst_57 = arith.constant 1.000000e+00 : f32
    %73 = vector.broadcast %cst_57 : f32 to vector<8x128xf32>
    %74 = arith.addf %73, %72 : vector<8x128xf32>
    %cst_58 = arith.constant 1.000000e+00 : f32
    %75 = vector.broadcast %cst_58 : f32 to vector<8x128xf32>
    %76 = arith.divf %75, %74 : vector<8x128xf32>
    %77 = arith.mulf %76, %76 : vector<8x128xf32>
    %cst_59 = arith.constant dense<0.000000e+00> : vector<8xf32>
    %78 = vector.multi_reduction <add>, %77, %cst_59 [1] : vector<8x128xf32> to vector<8xf32>
    %79 = vector.shape_cast %78 : vector<8xf32> to vector<8x1xf32>
    %80 = vector.broadcast %79 : vector<8x1xf32> to vector<8x128xf32>
    %81 = arith.divf %77, %80 : vector<8x128xf32>
    %c0_60 = arith.constant 0 : index
    %c0_61 = arith.constant 0 : index
    %82 = vector.load %arg20[%c0_60, %c0_61] : memref<8x128xf32, #tpu.memory_space<vmem>>, vector<8x128xf32>
    tpu.vector_store %arg20[%c0_60, %c0_61], %81 {strides = array<i32>} : memref<8x128xf32, #tpu.memory_space<vmem>>, vector<8x128xf32>,
    return
  }
  func.func @transform_0(%arg0: i32) -> (i32, i32) {
    %c0_i32 = arith.constant 0 : i32
    %c0_i32_0 = arith.constant 0 : i32
    return %arg0, %c0_i32 : i32, i32
  }
  func.func @transform_1(%arg0: i32) -> (i32, i32) {
    %c0_i32 = arith.constant 0 : i32
    %c0_i32_0 = arith.constant 0 : i32
    %c0_i32_1 = arith.constant 0 : i32
    return %c0_i32, %c0_i32_0 : i32, i32
  }
  func.func @transform_2(%arg0: i32) -> (i32, i32) {
    %c0_i32 = arith.constant 0 : i32
    %c0_i32_0 = arith.constant 0 : i32
    %c0_i32_1 = arith.constant 0 : i32
    return %c0_i32, %c0_i32_0 : i32, i32
  }
  func.func @transform_3(%arg0: i32) -> (i32, i32) {
    %c0_i32 = arith.constant 0 : i32
    %c0_i32_0 = arith.constant 0 : i32
    %c0_i32_1 = arith.constant 0 : i32
    return %c0_i32, %c0_i32_0 : i32, i32
  }
  func.func @transform_4(%arg0: i32) -> (i32, i32) {
    %c0_i32 = arith.constant 0 : i32
    %c0_i32_0 = arith.constant 0 : i32
    %c0_i32_1 = arith.constant 0 : i32
    return %c0_i32, %c0_i32_0 : i32, i32
  }
  func.func @transform_5(%arg0: i32) -> (i32, i32) {
    %c0_i32 = arith.constant 0 : i32
    %c0_i32_0 = arith.constant 0 : i32
    %c0_i32_1 = arith.constant 0 : i32
    return %c0_i32, %c0_i32_0 : i32, i32
  }
  func.func @transform_6(%arg0: i32) -> (i32, i32) {
    %c0_i32 = arith.constant 0 : i32
    %c0_i32_0 = arith.constant 0 : i32
    %c0_i32_1 = arith.constant 0 : i32
    return %c0_i32, %c0_i32_0 : i32, i32
  }
  func.func @transform_7(%arg0: i32) -> (i32, i32) {
    %c0_i32 = arith.constant 0 : i32
    %c0_i32_0 = arith.constant 0 : i32
    %c0_i32_1 = arith.constant 0 : i32
    return %c0_i32, %c0_i32_0 : i32, i32
  }
  func.func @transform_8(%arg0: i32) -> (i32, i32) {
    %c0_i32 = arith.constant 0 : i32
    %c0_i32_0 = arith.constant 0 : i32
    %c0_i32_1 = arith.constant 0 : i32
    return %c0_i32, %c0_i32_0 : i32, i32
  }
  func.func @transform_9(%arg0: i32) -> (i32, i32) {
    %c0_i32 = arith.constant 0 : i32
    %c0_i32_0 = arith.constant 0 : i32
    %c0_i32_1 = arith.constant 0 : i32
    return %c0_i32, %c0_i32_0 : i32, i32
  }
  func.func @transform_10(%arg0: i32) -> (i32, i32) {
    %c0_i32 = arith.constant 0 : i32
    %c0_i32_0 = arith.constant 0 : i32
    %c0_i32_1 = arith.constant 0 : i32
    return %c0_i32, %c0_i32_0 : i32, i32
  }
  func.func @transform_11(%arg0: i32) -> (i32, i32) {
    %c0_i32 = arith.constant 0 : i32
    %c0_i32_0 = arith.constant 0 : i32
    %c0_i32_1 = arith.constant 0 : i32
    return %c0_i32, %c0_i32_0 : i32, i32
  }
  func.func @transform_12(%arg0: i32) -> (i32, i32) {
    %c0_i32 = arith.constant 0 : i32
    %c0_i32_0 = arith.constant 0 : i32
    %c0_i32_1 = arith.constant 0 : i32
    return %c0_i32, %c0_i32_0 : i32, i32
  }
  func.func @transform_13(%arg0: i32) -> (i32, i32) {
    %c0_i32 = arith.constant 0 : i32
    %c0_i32_0 = arith.constant 0 : i32
    %c0_i32_1 = arith.constant 0 : i32
    return %c0_i32, %c0_i32_0 : i32, i32
  }
  func.func @transform_14(%arg0: i32) -> (i32, i32) {
    %c0_i32 = arith.constant 0 : i32
    %c0_i32_0 = arith.constant 0 : i32
    %c0_i32_1 = arith.constant 0 : i32
    return %c0_i32, %c0_i32_0 : i32, i32
  }
  func.func @transform_15(%arg0: i32) -> (i32, i32) {
    %c0_i32 = arith.constant 0 : i32
    %c0_i32_0 = arith.constant 0 : i32
    %c0_i32_1 = arith.constant 0 : i32
    return %c0_i32, %c0_i32_0 : i32, i32
  }
  func.func @transform_16(%arg0: i32) -> (i32, i32) {
    %c0_i32 = arith.constant 0 : i32
    %c0_i32_0 = arith.constant 0 : i32
    %c0_i32_1 = arith.constant 0 : i32
    return %c0_i32, %c0_i32_0 : i32, i32
  }
  func.func @transform_17(%arg0: i32) -> (i32, i32) {
    %c0_i32 = arith.constant 0 : i32
    %c0_i32_0 = arith.constant 0 : i32
    %c0_i32_1 = arith.constant 0 : i32
    return %c0_i32, %c0_i32_0 : i32, i32
  }
  func.func @transform_18(%arg0: i32) -> (i32, i32) {
    %c0_i32 = arith.constant 0 : i32
    %c0_i32_0 = arith.constant 0 : i32
    %c0_i32_1 = arith.constant 0 : i32
    return %c0_i32, %c0_i32_0 : i32, i32
  }
  func.func @transform_19(%arg0: i32) -> (i32, i32) {
    %c0_i32 = arith.constant 0 : i32
    %c0_i32_0 = arith.constant 0 : i32
    return %arg0, %c0_i32 : i32, i32
  }
  func.func @transform_20(%arg0: i32) -> (i32, i32) {
    %c0_i32 = arith.constant 0 : i32
    %c0_i32_0 = arith.constant 0 : i32
    return %arg0, %c0_i32 : i32, i32
  }
}

</mosaic_0001>

<llo_original>
// kernel: tpu_custom_call.1
$region0: #{tpu_custom_call.1}
  #allocation0 [shape = 'u32[]', space=smem, size = 0x4, offset = 0x4, fixed_abs, tag = 'smem constant byte address 0x4 - core index']
  #allocation1 [shape = 'u32[72,128]{1,0:T(1,128)}', space=vmem, size = 0x9000, scoped, tag = 'internal scratch']
  %s0 = inlined_call_operand.hbm [shape: f32[8,128], index: 0, kind: input, shape index: {}]
  %s1 = inlined_call_operand.hbm [shape: f32[128,128], index: 1, kind: input, shape index: {}]
  %s2 = inlined_call_operand.vmem [shape: f32[1,128], index: 2, kind: input, shape index: {}]
  %s3 = inlined_call_operand.hbm [shape: f32[128,128], index: 3, kind: input, shape index: {}]
  %s4 = inlined_call_operand.vmem [shape: f32[1,128], index: 4, kind: input, shape index: {}]
  %s5 = inlined_call_operand.hbm [shape: f32[128,128], index: 5, kind: input, shape index: {}]
  %s6 = inlined_call_operand.vmem [shape: f32[1,128], index: 6, kind: input, shape index: {}]
  %s7 = inlined_call_operand.hbm [shape: f32[128,128], index: 7, kind: input, shape index: {}]
  %s8 = inlined_call_operand.vmem [shape: f32[1,128], index: 8, kind: input, shape index: {}]
  %s9 = inlined_call_operand.hbm [shape: f32[128,128], index: 9, kind: input, shape index: {}]
  %s10 = inlined_call_operand.vmem [shape: f32[1,128], index: 10, kind: input, shape index: {}]
  %s11 = inlined_call_operand.hbm [shape: f32[128,128], index: 11, kind: input, shape index: {}]
  %s12 = inlined_call_operand.vmem [shape: f32[1,128], index: 12, kind: input, shape index: {}]
  %s13 = inlined_call_operand.hbm [shape: f32[128,128], index: 13, kind: input, shape index: {}]
  %s14 = inlined_call_operand.vmem [shape: f32[1,128], index: 14, kind: input, shape index: {}]
  %s15 = inlined_call_operand.hbm [shape: f32[128,128], index: 15, kind: input, shape index: {}]
  %s16 = inlined_call_operand.vmem [shape: f32[1,128], index: 16, kind: input, shape index: {}]
  %s17 = inlined_call_operand.hbm [shape: f32[128,128], index: 17, kind: input, shape index: {}]
  %s18 = inlined_call_operand.vmem [shape: f32[1,128], index: 18, kind: input, shape index: {}]
  %s19 = inlined_call_operand.hbm [shape: f32[8,128], index: 19, kind: output, shape index: {0}]
  %s20 = inlined_call_operand.hbm [shape: f32[8,128], index: 20, kind: output, shape index: {1}]
  %21 = xla_tuple %s19, %s20
  %s22 = sld [smem:[#allocation0]]
  $region134: #{tpu_custom_call.1} parent=0
    _
  %s24 = ssub.s32 1, %s22
  %s25 = scalar_select 0, %s24, %s22
  $region1: #{tpu_custom_call.1} parent=0
    #allocation2 [shape = 'u8[4096]{0}', space=vmem, size = 0x1000, scoped, tag = 'input window, operand 0, single buffered']
    #allocation3 [shape = 's32[1]{0}', space=sflag, size = 0x4, scoped, tag = 'scoped memory for tpu_custom_call.1']
    #allocation4 [shape = 's32[1]{0}', space=sflag, size = 0x4, scoped, tag = 'scoped memory for tpu_custom_call.1']
    #allocation5 [shape = 'u8[65536]{0}', space=vmem, size = 0x10000, scoped, tag = 'input window, operand 1, single buffered']
    #allocation6 [shape = 's32[1]{0}', space=sflag, size = 0x4, scoped, tag = 'scoped memory for tpu_custom_call.1']
    #allocation7 [shape = 'u8[65536]{0}', space=vmem, size = 0x10000, scoped, tag = 'input window, operand 3, single buffered']
    #allocation8 [shape = 'u8[65536]{0}', space=vmem, size = 0x10000, scoped, tag = 'input window, operand 5, single buffered']
    #allocation9 [shape = 's32[1]{0}', space=sflag, size = 0x4, scoped, tag = 'scoped memory for tpu_custom_call.1']
    #allocation10 [shape = 'u8[65536]{0}', space=vmem, size = 0x10000, scoped, tag = 'input window, operand 7, single buffered']
    #allocation11 [shape = 'u8[65536]{0}', space=vmem, size = 0x10000, scoped, tag = 'input window, operand 9, single buffered']
    #allocation12 [shape = 's32[1]{0}', space=sflag, size = 0x4, scoped, tag = 'scoped memory for tpu_custom_call.1']
    #allocation13 [shape = 'u8[65536]{0}', space=vmem, size = 0x10000, scoped, tag = 'input window, operand 11, single buffered']
    #allocation14 [shape = 'u8[65536]{0}', space=vmem, size = 0x10000, scoped, tag = 'input window, operand 13, single buffered']
    #allocation15 [shape = 's32[1]{0}', space=sflag, size = 0x4, scoped, tag = 'scoped memory for tpu_custom_call.1']
    #allocation16 [shape = 'u8[65536]{0}', space=vmem, size = 0x10000, scoped, tag = 'input window, operand 15, single buffered']
    #allocation17 [shape = 'u8[65536]{0}', space=vmem, size = 0x10000, scoped, tag = 'input window, operand 17, single buffered']
    #allocation18 [shape = 's32[1]{0}', space=sflag, size = 0x4, scoped, tag = 'scoped memory for tpu_custom_call.1']
    #allocation19 [shape = 'u8[4096]{0}', space=vmem, size = 0x1000, scoped, tag = 'output window, operand 0, single buffered']
    #allocation20 [shape = 'u8[4096]{0}', space=vmem, size = 0x1000, scoped, tag = 'output window, operand 1, single buffered']
    #allocation21 [shape = 's32[1]{0}', space=sflag, size = 0x4, scoped, tag = 'scoped memory for tpu_custom_call.1']
    %26 = vsyncpa [#allocation3], 0
    %27 = vsyncpa [#allocation6], 0
    %28 = vsyncpa [#allocation9], 0
    %29 = vsyncpa [#allocation12], 0
    %30 = vsyncpa [#allocation15], 0
    %31 = vsyncpa [#allocation18], 0
    %32 = vsyncpa [#allocation4], 0
    %33 = vsyncpa [#allocation21], 0
    // Predicated region
    $region2: #{tpu_custom_call.1} parent=1 // pred_check
      _
    $region3: #{tpu_custom_call.1} parent=1 // pred_check_branch
      %35 = sbr.rel (0) target = $region5
    $region4: #{tpu_custom_call.1} parent=1 // pred_region
      %37 = vsyncadd [#allocation3], 0
      %s39 = sshll.u32 %s0, 4
      %s40 = int_to_ptr.hbm [resolvable:$true] %s39
      %s41 = sshll.u32 [#allocation2], 4
      %s42 = int_to_ptr.vmem [resolvable:$true] %s41
      %44 = dma.hbm_to_vmem [thread:$0]  %s40, 128, %s42, [#allocation3]
    $region5: #{tpu_custom_call.1} parent=1 // pred_fallthru
      _
    // Predicated region
    $region6: #{tpu_custom_call.1} parent=1 // pred_check
      _
    $region7: #{tpu_custom_call.1} parent=1 // pred_check_branch
      %46 = sbr.rel (0) target = $region9
    $region8: #{tpu_custom_call.1} parent=1 // pred_region
      %48 = vsyncadd [#allocation6], 0
      %s49 = sshll.u32 %s1, 4
      %s50 = int_to_ptr.hbm [resolvable:$true] %s49
      %s51 = sshll.u32 [#allocation5], 4
      %s52 = int_to_ptr.vmem [resolvable:$true] %s51
      %57 = dma.hbm_to_vmem [thread:$0]  %s50, 2048, %s52, [#allocation6], 128, 128, 8
    $region9: #{tpu_custom_call.1} parent=1 // pred_fallthru
      _
    // Predicated region
    $region10: #{tpu_custom_call.1} parent=1 // pred_check
      _
    $region11: #{tpu_custom_call.1} parent=1 // pred_check_branch
      %59 = sbr.rel (0) target = $region13
    $region12: #{tpu_custom_call.1} parent=1 // pred_region
      _
    $region13: #{tpu_custom_call.1} parent=1 // pred_fallthru
      _
    // Predicated region
    $region14: #{tpu_custom_call.1} parent=1 // pred_check
      _
    $region15: #{tpu_custom_call.1} parent=1 // pred_check_branch
      %61 = sbr.rel (0) target = $region17
    $region16: #{tpu_custom_call.1} parent=1 // pred_region
      %63 = vsyncadd [#allocation6], 0
      %s64 = sshll.u32 %s3, 4
      %s65 = int_to_ptr.hbm [resolvable:$true] %s64
      %s66 = sshll.u32 [#allocation7], 4
      %s67 = int_to_ptr.vmem [resolvable:$true] %s66
      %72 = dma.hbm_to_vmem [thread:$0]  %s65, 2048, %s67, [#allocation6], 128, 128, 8
    $region17: #{tpu_custom_call.1} parent=1 // pred_fallthru
      _
    // Predicated region
    $region18: #{tpu_custom_call.1} parent=1 // pred_check
      _
    $region19: #{tpu_custom_call.1} parent=1 // pred_check_branch
      %74 = sbr.rel (0) target = $region21
    $region20: #{tpu_custom_call.1} parent=1 // pred_region
      _
    $region21: #{tpu_custom_call.1} parent=1 // pred_fallthru
      _
    // Predicated region
    $region22: #{tpu_custom_call.1} parent=1 // pred_check
      _
    $region23: #{tpu_custom_call.1} parent=1 // pred_check_branch
      %76 = sbr.rel (0) target = $region25
    $region24: #{tpu_custom_call.1} parent=1 // pred_region
      %78 = vsyncadd [#allocation9], 0
      %s79 = sshll.u32 %s5, 4
      %s80 = int_to_ptr.hbm [resolvable:$true] %s79
      %s81 = sshll.u32 [#allocation8], 4
      %s82 = int_to_ptr.vmem [resolvable:$true] %s81
      %87 = dma.hbm_to_vmem [thread:$0]  %s80, 2048, %s82, [#allocation9], 128, 128, 8
    $region25: #{tpu_custom_call.1} parent=1 // pred_fallthru
      _
    // Predicated region
    $region26: #{tpu_custom_call.1} parent=1 // pred_check
      _
    $region27: #{tpu_custom_call.1} parent=1 // pred_check_branch
      %89 = sbr.rel (0) target = $region29
    $region28: #{tpu_custom_call.1} parent=1 // pred_region
      _
    $region29: #{tpu_custom_call.1} parent=1 // pred_fallthru
      _
    // Predicated region
    $region30: #{tpu_custom_call.1} parent=1 // pred_check
      _
    $region31: #{tpu_custom_call.1} parent=1 // pred_check_branch
      %91 = sbr.rel (0) target = $region33
    $region32: #{tpu_custom_call.1} parent=1 // pred_region
      %93 = vsyncadd [#allocation9], 0
      %s94 = sshll.u32 %s7, 4
      %s95 = int_to_ptr.hbm [resolvable:$true] %s94
      %s96 = sshll.u32 [#allocation10], 4
      %s97 = int_to_ptr.vmem [resolvable:$true] %s96
      %102 = dma.hbm_to_vmem [thread:$0]  %s95, 2048, %s97, [#allocation9], 128, 128, 8
    $region33: #{tpu_custom_call.1} parent=1 // pred_fallthru
      _
    // Predicated region
    $region34: #{tpu_custom_call.1} parent=1 // pred_check
      _
    $region35: #{tpu_custom_call.1} parent=1 // pred_check_branch
      %104 = sbr.rel (0) target = $region37
    $region36: #{tpu_custom_call.1} parent=1 // pred_region
      _
    $region37: #{tpu_custom_call.1} parent=1 // pred_fallthru
      _
    // Predicated region
    $region38: #{tpu_custom_call.1} parent=1 // pred_check
      _
    $region39: #{tpu_custom_call.1} parent=1 // pred_check_branch
      %106 = sbr.rel (0) target = $region41
    $region40: #{tpu_custom_call.1} parent=1 // pred_region
      %108 = vsyncadd [#allocation12], 0
      %s109 = sshll.u32 %s9, 4
      %s110 = int_to_ptr.hbm [resolvable:$true] %s109
      %s111 = sshll.u32 [#allocation11], 4
      %s112 = int_to_ptr.vmem [resolvable:$true] %s111
      %117 = dma.hbm_to_vmem [thread:$0]  %s110, 2048, %s112, [#allocation12], 128, 128, 8
    $region41: #{tpu_custom_call.1} parent=1 // pred_fallthru
      _
    // Predicated region
    $region42: #{tpu_custom_call.1} parent=1 // pred_check
      _
    $region43: #{tpu_custom_call.1} parent=1 // pred_check_branch
      %119 = sbr.rel (0) target = $region45
    $region44: #{tpu_custom_call.1} parent=1 // pred_region
      _
    $region45: #{tpu_custom_call.1} parent=1 // pred_fallthru
      _
    // Predicated region
    $region46: #{tpu_custom_call.1} parent=1 // pred_check
      _
    $region47: #{tpu_custom_call.1} parent=1 // pred_check_branch
      %121 = sbr.rel (0) target = $region49
    $region48: #{tpu_custom_call.1} parent=1 // pred_region
      %123 = vsyncadd [#allocation12], 0
      %s124 = sshll.u32 %s11, 4
      %s125 = int_to_ptr.hbm [resolvable:$true] %s124
      %s126 = sshll.u32 [#allocation13], 4
      %s127 = int_to_ptr.vmem [resolvable:$true] %s126
      %132 = dma.hbm_to_vmem [thread:$0]  %s125, 2048, %s127, [#allocation12], 128, 128, 8
    $region49: #{tpu_custom_call.1} parent=1 // pred_fallthru
      _
    // Predicated region
    $region50: #{tpu_custom_call.1} parent=1 // pred_check
      _
    $region51: #{tpu_custom_call.1} parent=1 // pred_check_branch
      %134 = sbr.rel (0) target = $region53
    $region52: #{tpu_custom_call.1} parent=1 // pred_region
      _
    $region53: #{tpu_custom_call.1} parent=1 // pred_fallthru
      _
    // Predicated region
    $region54: #{tpu_custom_call.1} parent=1 // pred_check
      _
    $region55: #{tpu_custom_call.1} parent=1 // pred_check_branch
      %136 = sbr.rel (0) target = $region57
    $region56: #{tpu_custom_call.1} parent=1 // pred_region
      %138 = vsyncadd [#allocation15], 0
      %s139 = sshll.u32 %s13, 4
      %s140 = int_to_ptr.hbm [resolvable:$true] %s139
      %s141 = sshll.u32 [#allocation14], 4
      %s142 = int_to_ptr.vmem [resolvable:$true] %s141
      %147 = dma.hbm_to_vmem [thread:$0]  %s140, 2048, %s142, [#allocation15], 128, 128, 8
    $region57: #{tpu_custom_call.1} parent=1 // pred_fallthru
      _
    // Predicated region
    $region58: #{tpu_custom_call.1} parent=1 // pred_check
      _
    $region59: #{tpu_custom_call.1} parent=1 // pred_check_branch
      %149 = sbr.rel (0) target = $region61
    $region60: #{tpu_custom_call.1} parent=1 // pred_region
      _
    $region61: #{tpu_custom_call.1} parent=1 // pred_fallthru
      _
    // Predicated region
    $region62: #{tpu_custom_call.1} parent=1 // pred_check
      _
    $region63: #{tpu_custom_call.1} parent=1 // pred_check_branch
      %151 = sbr.rel (0) target = $region65
    $region64: #{tpu_custom_call.1} parent=1 // pred_region
      %153 = vsyncadd [#allocation15], 0
      %s154 = sshll.u32 %s15, 4
      %s155 = int_to_ptr.hbm [resolvable:$true] %s154
      %s156 = sshll.u32 [#allocation16], 4
      %s157 = int_to_ptr.vmem [resolvable:$true] %s156
      %162 = dma.hbm_to_vmem [thread:$0]  %s155, 2048, %s157, [#allocation15], 128, 128, 8
    $region65: #{tpu_custom_call.1} parent=1 // pred_fallthru
      _
    // Predicated region
    $region66: #{tpu_custom_call.1} parent=1 // pred_check
      _
    $region67: #{tpu_custom_call.1} parent=1 // pred_check_branch
      %164 = sbr.rel (0) target = $region69
    $region68: #{tpu_custom_call.1} parent=1 // pred_region
      _
    $region69: #{tpu_custom_call.1} parent=1 // pred_fallthru
      _
    // Predicated region
    $region70: #{tpu_custom_call.1} parent=1 // pred_check
      _
    $region71: #{tpu_custom_call.1} parent=1 // pred_check_branch
      %166 = sbr.rel (0) target = $region73
    $region72: #{tpu_custom_call.1} parent=1 // pred_region
      %168 = vsyncadd [#allocation18], 0
      %s169 = sshll.u32 %s17, 4
      %s170 = int_to_ptr.hbm [resolvable:$true] %s169
      %s171 = sshll.u32 [#allocation17], 4
      %s172 = int_to_ptr.vmem [resolvable:$true] %s171
      %177 = dma.hbm_to_vmem [thread:$0]  %s170, 2048, %s172, [#allocation18], 128, 128, 8
    $region73: #{tpu_custom_call.1} parent=1 // pred_fallthru
      _
    // Predicated region
    $region74: #{tpu_custom_call.1} parent=1 // pred_check
      _
    $region75: #{tpu_custom_call.1} parent=1 // pred_check_branch
      %179 = sbr.rel (0) target = $region77
    $region76: #{tpu_custom_call.1} parent=1 // pred_region
      _
    $region77: #{tpu_custom_call.1} parent=1 // pred_fallthru
      _
    // Predicated region
    $region78: #{tpu_custom_call.1} parent=1 // pred_check
      _
    $region79: #{tpu_custom_call.1} parent=1 // pred_check_branch
      %181 = sbr.rel (0) target = $region81
    $region80: #{tpu_custom_call.1} parent=1 // pred_region
      %183 = dma.done [#allocation3], 128
    $region81: #{tpu_custom_call.1} parent=1 // pred_fallthru
      _
    // Predicated region
    $region82: #{tpu_custom_call.1} parent=1 // pred_check
      _
    $region83: #{tpu_custom_call.1} parent=1 // pred_check_branch
      %185 = sbr.rel (0) target = $region85
    $region84: #{tpu_custom_call.1} parent=1 // pred_region
      %187 = dma.done [#allocation6], 2048
    $region85: #{tpu_custom_call.1} parent=1 // pred_fallthru
      _
    // Predicated region
    $region86: #{tpu_custom_call.1} parent=1 // pred_check
      _
    $region87: #{tpu_custom_call.1} parent=1 // pred_check_branch
      %189 = sbr.rel (0) target = $region89
    $region88: #{tpu_custom_call.1} parent=1 // pred_region
      %191 = dma.done [#allocation6], 2048
    $region89: #{tpu_custom_call.1} parent=1 // pred_fallthru
      _
    // Predicated region
    $region90: #{tpu_custom_call.1} parent=1 // pred_check
      _
    $region91: #{tpu_custom_call.1} parent=1 // pred_check_branch
      %193 = sbr.rel (0) target = $region93
    $region92: #{tpu_custom_call.1} parent=1 // pred_region
      %195 = dma.done [#allocation9], 2048
    $region93: #{tpu_custom_call.1} parent=1 // pred_fallthru
      _
    // Predicated region
    $region94: #{tpu_custom_call.1} parent=1 // pred_check
      _
    $region95: #{tpu_custom_call.1} parent=1 // pred_check_branch
      %197 = sbr.rel (0) target = $region97
    $region96: #{tpu_custom_call.1} parent=1 // pred_region
      %199 = dma.done [#allocation9], 2048
    $region97: #{tpu_custom_call.1} parent=1 // pred_fallthru
      _
    // Predicated region
    $region98: #{tpu_custom_call.1} parent=1 // pred_check
      _
    $region99: #{tpu_custom_call.1} parent=1 // pred_check_branch
      %201 = sbr.rel (0) target = $region101
    $region100: #{tpu_custom_call.1} parent=1 // pred_region
      %203 = dma.done [#allocation12], 2048
    $region101: #{tpu_custom_call.1} parent=1 // pred_fallthru
      _
    // Predicated region
    $region102: #{tpu_custom_call.1} parent=1 // pred_check
      _
    $region103: #{tpu_custom_call.1} parent=1 // pred_check_branch
      %205 = sbr.rel (0) target = $region105
    $region104: #{tpu_custom_call.1} parent=1 // pred_region
      %207 = dma.done [#allocation12], 2048
    $region105: #{tpu_custom_call.1} parent=1 // pred_fallthru
      _
    // Predicated region
    $region106: #{tpu_custom_call.1} parent=1 // pred_check
      _
    $region107: #{tpu_custom_call.1} parent=1 // pred_check_branch
      %209 = sbr.rel (0) target = $region109
    $region108: #{tpu_custom_call.1} parent=1 // pred_region
      %211 = dma.done [#allocation15], 2048
    $region109: #{tpu_custom_call.1} parent=1 // pred_fallthru
      _
    // Predicated region
    $region110: #{tpu_custom_call.1} parent=1 // pred_check
      _
    $region111: #{tpu_custom_call.1} parent=1 // pred_check_branch
      %213 = sbr.rel (0) target = $region113
    $region112: #{tpu_custom_call.1} parent=1 // pred_region
      %215 = dma.done [#allocation15], 2048
    $region113: #{tpu_custom_call.1} parent=1 // pred_fallthru
      _
    // Predicated region
    $region114: #{tpu_custom_call.1} parent=1 // pred_check
      _
    $region115: #{tpu_custom_call.1} parent=1 // pred_check_branch
      %217 = sbr.rel (0) target = $region117
    $region116: #{tpu_custom_call.1} parent=1 // pred_region
      %219 = dma.done [#allocation18], 2048
    $region117: #{tpu_custom_call.1} parent=1 // pred_fallthru
      _
    %v220 = vld [vmem:[#allocation2] sm:$0xff]
    %v221 = vld [vmem:[#allocation5] sm:$0xff]
    %v222 = vld [vmem:[#allocation5 + $0x8] sm:$0xff]
    %v223 = vld [vmem:[#allocation5 + $0x10] sm:$0xff]
    %v224 = vld [vmem:[#allocation5 + $0x18] sm:$0xff]
    %v225 = vld [vmem:[#allocation5 + $0x20] sm:$0xff]
    %v226 = vld [vmem:[#allocation5 + $0x28] sm:$0xff]
    %v227 = vld [vmem:[#allocation5 + $0x30] sm:$0xff]
    %v228 = vld [vmem:[#allocation5 + $0x38] sm:$0xff]
    %v229 = vld [vmem:[#allocation5 + $0x40] sm:$0xff]
    %v230 = vld [vmem:[#allocation5 + $0x48] sm:$0xff]
    %v231 = vld [vmem:[#allocation5 + $0x50] sm:$0xff]
    %v232 = vld [vmem:[#allocation5 + $0x58] sm:$0xff]
    %v233 = vld [vmem:[#allocation5 + $0x60] sm:$0xff]
    %v234 = vld [vmem:[#allocation5 + $0x68] sm:$0xff]
    %v235 = vld [vmem:[#allocation5 + $0x70] sm:$0xff]
    %v236 = vld [vmem:[#allocation5 + $0x78] sm:$0xff]
    %v237 = vld [vmem:[%s2] sm:$0x1]
    %v239 = vperm.slane %v237, 0
    %241 = vmatpush.msra.mxu0 %v236
    %242 = vmatpush.msra.mxu0 %v235
    %243 = vmatpush.msra.mxu0 %v234
    %244 = vmatpush.msra.mxu0 %v233
    %245 = vmatpush.msra.mxu0 %v232
    %246 = vmatpush.msra.mxu0 %v231
    %247 = vmatpush.msra.mxu0 %v230
    %248 = vmatpush.msra.mxu0 %v229
    %249 = vmatpush.msra.mxu0 %v228
    %250 = vmatpush.msra.mxu0 %v227
    %251 = vmatpush.msra.mxu0 %v226
    %252 = vmatpush.msra.mxu0 %v225
    %253 = vmatpush.msra.mxu0 %v224
    %254 = vmatpush.msra.mxu0 %v223
    %255 = vmatpush.msra.mxu0 %v222
    %256 = vmatpush.msra.mxu0 %v221
    %257 = vmatmul.f32.gmra.mxu0 %v220
    %v258 = vpop.f32.mrf.mxu0
    %v259 = vadd.f32 %v239, %v258
    %260 = vdwg.mxu0
    %v261 = vmax.f32 %v259, 0.0
    %v262 = vld [vmem:[#allocation7] sm:$0xff]
    %v263 = vld [vmem:[#allocation7 + $0x8] sm:$0xff]
    %v264 = vld [vmem:[#allocation7 + $0x10] sm:$0xff]
    %v265 = vld [vmem:[#allocation7 + $0x18] sm:$0xff]
    %v266 = vld [vmem:[#allocation7 + $0x20] sm:$0xff]
    %v267 = vld [vmem:[#allocation7 + $0x28] sm:$0xff]
    %v268 = vld [vmem:[#allocation7 + $0x30] sm:$0xff]
    %v269 = vld [vmem:[#allocation7 + $0x38] sm:$0xff]
    %v270 = vld [vmem:[#allocation7 + $0x40] sm:$0xff]
    %v271 = vld [vmem:[#allocation7 + $0x48] sm:$0xff]
    %v272 = vld [vmem:[#allocation7 + $0x50] sm:$0xff]
    %v273 = vld [vmem:[#allocation7 + $0x58] sm:$0xff]
    %v274 = vld [vmem:[#allocation7 + $0x60] sm:$0xff]
    %v275 = vld [vmem:[#allocation7 + $0x68] sm:$0xff]
    %v276 = vld [vmem:[#allocation7 + $0x70] sm:$0xff]
    %v277 = vld [vmem:[#allocation7 + $0x78] sm:$0xff]
    %v278 = vld [vmem:[%s4] sm:$0x1]
    %v280 = vperm.slane %v278, 0
    %282 = vmatpush.msra.mxu0 %v277
    %283 = vmatpush.msra.mxu0 %v276
    %284 = vmatpush.msra.mxu0 %v275
    %285 = vmatpush.msra.mxu0 %v274
    %286 = vmatpush.msra.mxu0 %v273
    %287 = vmatpush.msra.mxu0 %v272
    %288 = vmatpush.msra.mxu0 %v271
    %289 = vmatpush.msra.mxu0 %v270
    %290 = vmatpush.msra.mxu0 %v269
    %291 = vmatpush.msra.mxu0 %v268
    %292 = vmatpush.msra.mxu0 %v267
    %293 = vmatpush.msra.mxu0 %v266
    %294 = vmatpush.msra.mxu0 %v265
    %295 = vmatpush.msra.mxu0 %v264
    %296 = vmatpush.msra.mxu0 %v263
    %297 = vmatpush.msra.mxu0 %v262
    %298 = vmatmul.f32.gmra.mxu0 %v261
    %v299 = vpop.f32.mrf.mxu0
    %v300 = vadd.f32 %v280, %v299
    %301 = vdwg.mxu0
    %v302 = vmax.f32 %v300, 0.0
    %v303 = vld [vmem:[#allocation8] sm:$0xff]
    %v304 = vld [vmem:[#allocation8 + $0x8] sm:$0xff]
    %v305 = vld [vmem:[#allocation8 + $0x10] sm:$0xff]
    %v306 = vld [vmem:[#allocation8 + $0x18] sm:$0xff]
    %v307 = vld [vmem:[#allocation8 + $0x20] sm:$0xff]
    %v308 = vld [vmem:[#allocation8 + $0x28] sm:$0xff]
    %v309 = vld [vmem:[#allocation8 + $0x30] sm:$0xff]
    %v310 = vld [vmem:[#allocation8 + $0x38] sm:$0xff]
    %v311 = vld [vmem:[#allocation8 + $0x40] sm:$0xff]
    %v312 = vld [vmem:[#allocation8 + $0x48] sm:$0xff]
    %v313 = vld [vmem:[#allocation8 + $0x50] sm:$0xff]
    %v314 = vld [vmem:[#allocation8 + $0x58] sm:$0xff]
    %v315 = vld [vmem:[#allocation8 + $0x60] sm:$0xff]
    %v316 = vld [vmem:[#allocation8 + $0x68] sm:$0xff]
    %v317 = vld [vmem:[#allocation8 + $0x70] sm:$0xff]
    %v318 = vld [vmem:[#allocation8 + $0x78] sm:$0xff]
    %v319 = vld [vmem:[%s6] sm:$0x1]
    %v321 = vperm.slane %v319, 0
    %323 = vmatpush.msra.mxu0 %v318
    %324 = vmatpush.msra.mxu0 %v317
    %325 = vmatpush.msra.mxu0 %v316
    %326 = vmatpush.msra.mxu0 %v315
    %327 = vmatpush.msra.mxu0 %v314
    %328 = vmatpush.msra.mxu0 %v313
    %329 = vmatpush.msra.mxu0 %v312
    %330 = vmatpush.msra.mxu0 %v311
    %331 = vmatpush.msra.mxu0 %v310
    %332 = vmatpush.msra.mxu0 %v309
    %333 = vmatpush.msra.mxu0 %v308
    %334 = vmatpush.msra.mxu0 %v307
    %335 = vmatpush.msra.mxu0 %v306
    %336 = vmatpush.msra.mxu0 %v305
    %337 = vmatpush.msra.mxu0 %v304
    %338 = vmatpush.msra.mxu0 %v303
    %339 = vmatmul.f32.gmra.mxu0 %v302
    %v340 = vpop.f32.mrf.mxu0
    %v341 = vadd.f32 %v321, %v340
    %342 = vdwg.mxu0
    %v343 = vmax.f32 %v341, 0.0
    %v344 = vld [vmem:[#allocation10] sm:$0xff]
    %v345 = vld [vmem:[#allocation10 + $0x8] sm:$0xff]
    %v346 = vld [vmem:[#allocation10 + $0x10] sm:$0xff]
    %v347 = vld [vmem:[#allocation10 + $0x18] sm:$0xff]
    %v348 = vld [vmem:[#allocation10 + $0x20] sm:$0xff]
    %v349 = vld [vmem:[#allocation10 + $0x28] sm:$0xff]
    %v350 = vld [vmem:[#allocation10 + $0x30] sm:$0xff]
    %v351 = vld [vmem:[#allocation10 + $0x38] sm:$0xff]
    %v352 = vld [vmem:[#allocation10 + $0x40] sm:$0xff]
    %v353 = vld [vmem:[#allocation10 + $0x48] sm:$0xff]
    %v354 = vld [vmem:[#allocation10 + $0x50] sm:$0xff]
    %v355 = vld [vmem:[#allocation10 + $0x58] sm:$0xff]
    %v356 = vld [vmem:[#allocation10 + $0x60] sm:$0xff]
    %v357 = vld [vmem:[#allocation10 + $0x68] sm:$0xff]
    %v358 = vld [vmem:[#allocation10 + $0x70] sm:$0xff]
    %v359 = vld [vmem:[#allocation10 + $0x78] sm:$0xff]
    %v360 = vld [vmem:[%s8] sm:$0x1]
    %v362 = vperm.slane %v360, 0
    %364 = vmatpush.msra.mxu0 %v359
    %365 = vmatpush.msra.mxu0 %v358
    %366 = vmatpush.msra.mxu0 %v357
    %367 = vmatpush.msra.mxu0 %v356
    %368 = vmatpush.msra.mxu0 %v355
    %369 = vmatpush.msra.mxu0 %v354
    %370 = vmatpush.msra.mxu0 %v353
    %371 = vmatpush.msra.mxu0 %v352
    %372 = vmatpush.msra.mxu0 %v351
    %373 = vmatpush.msra.mxu0 %v350
    %374 = vmatpush.msra.mxu0 %v349
    %375 = vmatpush.msra.mxu0 %v348
    %376 = vmatpush.msra.mxu0 %v347
    %377 = vmatpush.msra.mxu0 %v346
    %378 = vmatpush.msra.mxu0 %v345
    %379 = vmatpush.msra.mxu0 %v344
    %380 = vmatmul.f32.gmra.mxu0 %v343
    %v381 = vpop.f32.mrf.mxu0
    %v382 = vadd.f32 %v362, %v381
    %383 = vdwg.mxu0
    %v384 = vld [vmem:[#allocation11] sm:$0xff]
    %v385 = vld [vmem:[#allocation11 + $0x8] sm:$0xff]
    %v386 = vld [vmem:[#allocation11 + $0x10] sm:$0xff]
    %v387 = vld [vmem:[#allocation11 + $0x18] sm:$0xff]
    %v388 = vld [vmem:[#allocation11 + $0x20] sm:$0xff]
    %v389 = vld [vmem:[#allocation11 + $0x28] sm:$0xff]
    %v390 = vld [vmem:[#allocation11 + $0x30] sm:$0xff]
    %v391 = vld [vmem:[#allocation11 + $0x38] sm:$0xff]
    %v392 = vld [vmem:[#allocation11 + $0x40] sm:$0xff]
    %v393 = vld [vmem:[#allocation11 + $0x48] sm:$0xff]
    %v394 = vld [vmem:[#allocation11 + $0x50] sm:$0xff]
    %v395 = vld [vmem:[#allocation11 + $0x58] sm:$0xff]
    %v396 = vld [vmem:[#allocation11 + $0x60] sm:$0xff]
    %v397 = vld [vmem:[#allocation11 + $0x68] sm:$0xff]
    %v398 = vld [vmem:[#allocation11 + $0x70] sm:$0xff]
    %v399 = vld [vmem:[#allocation11 + $0x78] sm:$0xff]
    %v400 = vld [vmem:[%s10] sm:$0x1]
    %v402 = vperm.slane %v400, 0
    %404 = vmatpush.msra.mxu0 %v399
    %405 = vmatpush.msra.mxu0 %v398
    %406 = vmatpush.msra.mxu0 %v397
    %407 = vmatpush.msra.mxu0 %v396
    %408 = vmatpush.msra.mxu0 %v395
    %409 = vmatpush.msra.mxu0 %v394
    %410 = vmatpush.msra.mxu0 %v393
    %411 = vmatpush.msra.mxu0 %v392
    %412 = vmatpush.msra.mxu0 %v391
    %413 = vmatpush.msra.mxu0 %v390
    %414 = vmatpush.msra.mxu0 %v389
    %415 = vmatpush.msra.mxu0 %v388
    %416 = vmatpush.msra.mxu0 %v387
    %417 = vmatpush.msra.mxu0 %v386
    %418 = vmatpush.msra.mxu0 %v385
    %419 = vmatpush.msra.mxu0 %v384
    %420 = vmatmul.f32.gmra.mxu0 %v382
    %v421 = vpop.f32.mrf.mxu0
    %v422 = vadd.f32 %v402, %v421
    %423 = vdwg.mxu0
    %v424 = vmax.f32 %v422, 0.0
    %v425 = vld [vmem:[#allocation13] sm:$0xff]
    %v426 = vld [vmem:[#allocation13 + $0x8] sm:$0xff]
    %v427 = vld [vmem:[#allocation13 + $0x10] sm:$0xff]
    %v428 = vld [vmem:[#allocation13 + $0x18] sm:$0xff]
    %v429 = vld [vmem:[#allocation13 + $0x20] sm:$0xff]
    %v430 = vld [vmem:[#allocation13 + $0x28] sm:$0xff]
    %v431 = vld [vmem:[#allocation13 + $0x30] sm:$0xff]
    %v432 = vld [vmem:[#allocation13 + $0x38] sm:$0xff]
    %v433 = vld [vmem:[#allocation13 + $0x40] sm:$0xff]
    %v434 = vld [vmem:[#allocation13 + $0x48] sm:$0xff]
    %v435 = vld [vmem:[#allocation13 + $0x50] sm:$0xff]
    %v436 = vld [vmem:[#allocation13 + $0x58] sm:$0xff]
    %v437 = vld [vmem:[#allocation13 + $0x60] sm:$0xff]
    %v438 = vld [vmem:[#allocation13 + $0x68] sm:$0xff]
    %v439 = vld [vmem:[#allocation13 + $0x70] sm:$0xff]
    %v440 = vld [vmem:[#allocation13 + $0x78] sm:$0xff]
    %v441 = vld [vmem:[%s12] sm:$0x1]
    %v443 = vperm.slane %v441, 0
    %445 = vmatpush.msra.mxu0 %v440
    %446 = vmatpush.msra.mxu0 %v439
    %447 = vmatpush.msra.mxu0 %v438
    %448 = vmatpush.msra.mxu0 %v437
    %449 = vmatpush.msra.mxu0 %v436
    %450 = vmatpush.msra.mxu0 %v435
    %451 = vmatpush.msra.mxu0 %v434
    %452 = vmatpush.msra.mxu0 %v433
    %453 = vmatpush.msra.mxu0 %v432
    %454 = vmatpush.msra.mxu0 %v431
    %455 = vmatpush.msra.mxu0 %v430
    %456 = vmatpush.msra.mxu0 %v429
    %457 = vmatpush.msra.mxu0 %v428
    %458 = vmatpush.msra.mxu0 %v427
    %459 = vmatpush.msra.mxu0 %v426
    %460 = vmatpush.msra.mxu0 %v425
    %461 = vmatmul.f32.gmra.mxu0 %v424
    %v462 = vpop.f32.mrf.mxu0
    %v463 = vadd.f32 %v443, %v462
    %464 = vdwg.mxu0
    %v465 = vmax.f32 %v463, 0.0
    %v466 = vld [vmem:[#allocation14] sm:$0xff]
    %v467 = vld [vmem:[#allocation14 + $0x8] sm:$0xff]
    %v468 = vld [vmem:[#allocation14 + $0x10] sm:$0xff]
    %v469 = vld [vmem:[#allocation14 + $0x18] sm:$0xff]
    %v470 = vld [vmem:[#allocation14 + $0x20] sm:$0xff]
    %v471 = vld [vmem:[#allocation14 + $0x28] sm:$0xff]
    %v472 = vld [vmem:[#allocation14 + $0x30] sm:$0xff]
    %v473 = vld [vmem:[#allocation14 + $0x38] sm:$0xff]
    %v474 = vld [vmem:[#allocation14 + $0x40] sm:$0xff]
    %v475 = vld [vmem:[#allocation14 + $0x48] sm:$0xff]
    %v476 = vld [vmem:[#allocation14 + $0x50] sm:$0xff]
    %v477 = vld [vmem:[#allocation14 + $0x58] sm:$0xff]
    %v478 = vld [vmem:[#allocation14 + $0x60] sm:$0xff]
    %v479 = vld [vmem:[#allocation14 + $0x68] sm:$0xff]
    %v480 = vld [vmem:[#allocation14 + $0x70] sm:$0xff]
    %v481 = vld [vmem:[#allocation14 + $0x78] sm:$0xff]
    %v482 = vld [vmem:[%s14] sm:$0x1]
    %v484 = vperm.slane %v482, 0
    %486 = vmatpush.msra.mxu0 %v481
    %487 = vmatpush.msra.mxu0 %v480
    %488 = vmatpush.msra.mxu0 %v479
    %489 = vmatpush.msra.mxu0 %v478
    %490 = vmatpush.msra.mxu0 %v477
    %491 = vmatpush.msra.mxu0 %v476
    %492 = vmatpush.msra.mxu0 %v475
    %493 = vmatpush.msra.mxu0 %v474
    %494 = vmatpush.msra.mxu0 %v473
    %495 = vmatpush.msra.mxu0 %v472
    %496 = vmatpush.msra.mxu0 %v471
    %497 = vmatpush.msra.mxu0 %v470
    %498 = vmatpush.msra.mxu0 %v469
    %499 = vmatpush.msra.mxu0 %v468
    %500 = vmatpush.msra.mxu0 %v467
    %501 = vmatpush.msra.mxu0 %v466
    %502 = vmatmul.f32.gmra.mxu0 %v465
    %v503 = vpop.f32.mrf.mxu0
    %v504 = vadd.f32 %v484, %v503
    %505 = vdwg.mxu0
    %v506 = vmax.f32 %v504, 0.0
    %v507 = vld [vmem:[#allocation16] sm:$0xff]
    %v508 = vld [vmem:[#allocation16 + $0x8] sm:$0xff]
    %v509 = vld [vmem:[#allocation16 + $0x10] sm:$0xff]
    %v510 = vld [vmem:[#allocation16 + $0x18] sm:$0xff]
    %v511 = vld [vmem:[#allocation16 + $0x20] sm:$0xff]
    %v512 = vld [vmem:[#allocation16 + $0x28] sm:$0xff]
    %v513 = vld [vmem:[#allocation16 + $0x30] sm:$0xff]
    %v514 = vld [vmem:[#allocation16 + $0x38] sm:$0xff]
    %v515 = vld [vmem:[#allocation16 + $0x40] sm:$0xff]
    %v516 = vld [vmem:[#allocation16 + $0x48] sm:$0xff]
    %v517 = vld [vmem:[#allocation16 + $0x50] sm:$0xff]
    %v518 = vld [vmem:[#allocation16 + $0x58] sm:$0xff]
    %v519 = vld [vmem:[#allocation16 + $0x60] sm:$0xff]
    %v520 = vld [vmem:[#allocation16 + $0x68] sm:$0xff]
    %v521 = vld [vmem:[#allocation16 + $0x70] sm:$0xff]
    %v522 = vld [vmem:[#allocation16 + $0x78] sm:$0xff]
    %v523 = vld [vmem:[%s16] sm:$0x1]
    %v525 = vperm.slane %v523, 0
    %527 = vmatpush.msra.mxu0 %v522
    %528 = vmatpush.msra.mxu0 %v521
    %529 = vmatpush.msra.mxu0 %v520
    %530 = vmatpush.msra.mxu0 %v519
    %531 = vmatpush.msra.mxu0 %v518
    %532 = vmatpush.msra.mxu0 %v517
    %533 = vmatpush.msra.mxu0 %v516
    %534 = vmatpush.msra.mxu0 %v515
    %535 = vmatpush.msra.mxu0 %v514
    %536 = vmatpush.msra.mxu0 %v513
    %537 = vmatpush.msra.mxu0 %v512
    %538 = vmatpush.msra.mxu0 %v511
    %539 = vmatpush.msra.mxu0 %v510
    %540 = vmatpush.msra.mxu0 %v509
    %541 = vmatpush.msra.mxu0 %v508
    %542 = vmatpush.msra.mxu0 %v507
    %543 = vmatmul.f32.gmra.mxu0 %v506
    %v544 = vpop.f32.mrf.mxu0
    %v545 = vadd.f32 %v525, %v544
    %546 = vdwg.mxu0
    %v547 = vxor.u32 %v545, 2147483648
    %v548 = vmul.f32 %v547, 1.442695
    %v549 = vpow.pop %v548
    %v550 = vadd.f32 %v549, 1.0
    %v551 = vrcp.pop %v550
    %v552 = vmul.f32 %v550, %v551
    %v553 = vsub.f32 1.0, %v552
    %v554 = vmul.f32 %v551, %v553
    %v555 = vadd.f32 %v551, %v554
    %vm556 = vweird.f32 %v550
    %vm557 = vweird.f32 %v551
    %vm558 = vmor %vm556, %vm557
    %v559 = vsel %vm558, %v551, %v555
    %v560 = vand.u32 2147483647, %v550
    %vm561 = vcmp.eq.f32.partialorder %v560, 8.507059e+37
    %v562 = vand.u32 %v550, 2147483648
    %v563 = vor.u32 1.1754944e-38, %v562
    %v564 = vsel %vm561, %v563, %v559
    %v565 = vmul.f32 1.0, %v564
    %566 = vst [vmem:[#allocation20] sm:$0xff] %v565
    %v567 = vld [vmem:[#allocation17] sm:$0xff]
    %v568 = vld [vmem:[#allocation17 + $0x8] sm:$0xff]
    %v569 = vld [vmem:[#allocation17 + $0x10] sm:$0xff]
    %v570 = vld [vmem:[#allocation17 + $0x18] sm:$0xff]
    %v571 = vld [vmem:[#allocation17 + $0x20] sm:$0xff]
    %v572 = vld [vmem:[#allocation17 + $0x28] sm:$0xff]
    %v573 = vld [vmem:[#allocation17 + $0x30] sm:$0xff]
    %v574 = vld [vmem:[#allocation17 + $0x38] sm:$0xff]
    %v575 = vld [vmem:[#allocation17 + $0x40] sm:$0xff]
    %v576 = vld [vmem:[#allocation17 + $0x48] sm:$0xff]
    %v577 = vld [vmem:[#allocation17 + $0x50] sm:$0xff]
    %v578 = vld [vmem:[#allocation17 + $0x58] sm:$0xff]
    %v579 = vld [vmem:[#allocation17 + $0x60] sm:$0xff]
    %v580 = vld [vmem:[#allocation17 + $0x68] sm:$0xff]
    %v581 = vld [vmem:[#allocation17 + $0x70] sm:$0xff]
    %v582 = vld [vmem:[#allocation17 + $0x78] sm:$0xff]
    %583 = vmatpush.msra.mxu0 %v582
    %584 = vmatpush.msra.mxu0 %v581
    %585 = vmatpush.msra.mxu0 %v580
    %586 = vmatpush.msra.mxu0 %v579
    %587 = vmatpush.msra.mxu0 %v578
    %588 = vmatpush.msra.mxu0 %v577
    %589 = vmatpush.msra.mxu0 %v576
    %590 = vmatpush.msra.mxu0 %v575
    %591 = vmatpush.msra.mxu0 %v574
    %592 = vmatpush.msra.mxu0 %v573
    %593 = vmatpush.msra.mxu0 %v572
    %594 = vmatpush.msra.mxu0 %v571
    %595 = vmatpush.msra.mxu0 %v570
    %596 = vmatpush.msra.mxu0 %v569
    %597 = vmatpush.msra.mxu0 %v568
    %598 = vmatpush.msra.mxu0 %v567
    %599 = vmatmul.f32.gmra.mxu0 %v382
    %v600 = vpop.f32.mrf.mxu0
    %v601 = vadd.f32 0.0, %v600
    %602 = vdwg.mxu0
    %v603 = vmul.f32 %v382, %v382
    %604 = vadd.xlane.f32.xlu0 %v603
    %v605 = vpop.xlane.xlu0 %604
    %v606 = vld [vmem:[%s18] sm:$0x1]
    %v608 = vperm.slane %v606, 0
    %v610 = vadd.f32 %v605, %v608
    %v611 = vmul.f32 %v601, 2.0
    %v612 = vsub.f32 %v610, %v611
    %v613 = vmax.f32 %v612, 0.0
    %v614 = vadd.f32 %v613, 1.0
    %v615 = vrcp.pop %v614
    %v616 = vmul.f32 %v614, %v615
    %v617 = vsub.f32 1.0, %v616
    %v618 = vmul.f32 %v615, %v617
    %v619 = vadd.f32 %v615, %v618
    %vm620 = vweird.f32 %v614
    %vm621 = vweird.f32 %v615
    %vm622 = vmor %vm620, %vm621
    %v623 = vsel %vm622, %v615, %v619
    %v624 = vand.u32 2147483647, %v614
    %vm625 = vcmp.eq.f32.partialorder %v624, 8.507059e+37
    %v626 = vand.u32 %v614, 2147483648
    %v627 = vor.u32 1.1754944e-38, %v626
    %v628 = vsel %vm625, %v627, %v623
    %v629 = vmul.f32 1.0, %v628
    %v630 = vmul.f32 %v629, %v629
    %631 = vadd.xlane.f32.xlu0 %v630
    %v632 = vpop.xlane.xlu0 %631
    %v633 = vrcp.pop %v632
    %v634 = vmul.f32 %v632, %v633
    %v635 = vsub.f32 1.0, %v634
    %v636 = vmul.f32 %v633, %v635
    %v637 = vadd.f32 %v633, %v636
    %vm638 = vweird.f32 %v632
    %vm639 = vweird.f32 %v633
    %vm640 = vmor %vm638, %vm639
    %v641 = vsel %vm640, %v633, %v637
    %v642 = vand.u32 2147483647, %v632
    %vm643 = vcmp.eq.f32.partialorder %v642, 8.507059e+37
    %v644 = vand.u32 %v632, 2147483648
    %v645 = vor.u32 1.1754944e-38, %v644
    %v646 = vsel %vm643, %v645, %v641
    %v647 = vmul.f32 %v630, %v646
    %648 = vst [vmem:[#allocation19] sm:$0xff] %v647
    // Predicated region
    $region118: #{tpu_custom_call.1} parent=1 // pred_check
      _
    $region119: #{tpu_custom_call.1} parent=1 // pred_check_branch
      %650 = sbr.rel (0) target = $region121
    $region120: #{tpu_custom_call.1} parent=1 // pred_region
      %652 = vsyncadd [#allocation4], 0
      %s654 = sshll.u32 [#allocation19], 4
      %s655 = int_to_ptr.vmem [resolvable:$true] %s654
      %s656 = sshll.u32 %s19, 4
      %s657 = int_to_ptr.hbm [resolvable:$true] %s656
      %659 = dma.vmem_to_hbm [thread:$0]  %s655, 128, %s657, [#allocation4]
    $region121: #{tpu_custom_call.1} parent=1 // pred_fallthru
      _
    // Predicated region
    $region122: #{tpu_custom_call.1} parent=1 // pred_check
      _
    $region123: #{tpu_custom_call.1} parent=1 // pred_check_branch
      %661 = sbr.rel (0) target = $region125
    $region124: #{tpu_custom_call.1} parent=1 // pred_region
      %663 = vsyncadd [#allocation21], 0
      %s665 = sshll.u32 [#allocation20], 4
      %s666 = int_to_ptr.vmem [resolvable:$true] %s665
      %s667 = sshll.u32 %s20, 4
      %s668 = int_to_ptr.hbm [resolvable:$true] %s667
      %670 = dma.vmem_to_hbm [thread:$0]  %s666, 128, %s668, [#allocation21]
    $region125: #{tpu_custom_call.1} parent=1 // pred_fallthru
      _
    // Predicated region
    $region126: #{tpu_custom_call.1} parent=1 // pred_check
      _
    $region127: #{tpu_custom_call.1} parent=1 // pred_check_branch
      %672 = sbr.rel (0) target = $region129
    $region128: #{tpu_custom_call.1} parent=1 // pred_region
      %674 = dma.done [#allocation4], 128
    $region129: #{tpu_custom_call.1} parent=1 // pred_fallthru
      _
    // Predicated region
    $region130: #{tpu_custom_call.1} parent=1 // pred_check
      _
    $region131: #{tpu_custom_call.1} parent=1 // pred_check_branch
      %676 = sbr.rel (0) target = $region133
    $region132: #{tpu_custom_call.1} parent=1 // pred_region
      %678 = dma.done [#allocation21], 128
    $region133: #{tpu_custom_call.1} parent=1 // pred_fallthru
      _
    %679 = vsyncpa [#allocation3], 1
    %680 = vsyncpa [#allocation6], 1
    %681 = vsyncpa [#allocation9], 1
    %682 = vsyncpa [#allocation12], 1
    %683 = vsyncpa [#allocation15], 1
    %684 = vsyncpa [#allocation18], 1
    %685 = vsyncpa [#allocation4], 1
    %686 = vsyncpa [#allocation21], 1

// kernel: tpu_custom_call.1
$region0: #{tpu_custom_call.1}
  #allocation0 [shape = 'u32[]', space=smem, size = 0x4, offset = 0x4, fixed_abs, tag = 'smem constant byte address 0x4 - core index']
  #allocation1 [shape = 'u32[72,128]{1,0:T(1,128)}', space=vmem, size = 0x9000, scoped, tag = 'internal scratch']
  %s0 = inlined_call_operand.hbm [shape: f32[8,128], index: 0, kind: input, shape index: {}]
  %s1 = inlined_call_operand.hbm [shape: f32[128,128], index: 1, kind: input, shape index: {}]
  %s2 = inlined_call_operand.vmem [shape: f32[1,128], index: 2, kind: input, shape index: {}]
  %s3 = inlined_call_operand.hbm [shape: f32[128,128], index: 3, kind: input, shape index: {}]
  %s4 = inlined_call_operand.vmem [shape: f32[1,128], index: 4, kind: input, shape index: {}]
  %s5 = inlined_call_operand.hbm [shape: f32[128,128], index: 5, kind: input, shape index: {}]
  %s6 = inlined_call_operand.vmem [shape: f32[1,128], index: 6, kind: input, shape index: {}]
  %s7 = inlined_call_operand.hbm [shape: f32[128,128], index: 7, kind: input, shape index: {}]
  %s8 = inlined_call_operand.vmem [shape: f32[1,128], index: 8, kind: input, shape index: {}]
  %s9 = inlined_call_operand.hbm [shape: f32[128,128], index: 9, kind: input, shape index: {}]
  %s10 = inlined_call_operand.vmem [shape: f32[1,128], index: 10, kind: input, shape index: {}]
  %s11 = inlined_call_operand.hbm [shape: f32[128,128], index: 11, kind: input, shape index: {}]
  %s12 = inlined_call_operand.vmem [shape: f32[1,128], index: 12, kind: input, shape index: {}]
  %s13 = inlined_call_operand.hbm [shape: f32[128,128], index: 13, kind: input, shape index: {}]
  %s14 = inlined_call_operand.vmem [shape: f32[1,128], index: 14, kind: input, shape index: {}]
  %s15 = inlined_call_operand.hbm [shape: f32[128,128], index: 15, kind: input, shape index: {}]
  %s16 = inlined_call_operand.vmem [shape: f32[1,128], index: 16, kind: input, shape index: {}]
  %s17 = inlined_call_operand.hbm [shape: f32[128,128], index: 17, kind: input, shape index: {}]
  %s18 = inlined_call_operand.vmem [shape: f32[1,128], index: 18, kind: input, shape index: {}]
  %s19 = inlined_call_operand.hbm [shape: f32[8,128], index: 19, kind: output, shape index: {0}]
  %s20 = inlined_call_operand.hbm [shape: f32[8,128], index: 20, kind: output, shape index: {1}]
  %21 = xla_tuple %s19, %s20
  %s22 = sld [smem:[#allocation0]]
  $region134: #{tpu_custom_call.1} parent=0
    _
  %s24 = ssub.s32 1, %s22
  %s25 = scalar_select 0, %s24, %s22
  $region1: #{tpu_custom_call.1} parent=0
    #allocation2 [shape = 'u8[4096]{0}', space=vmem, size = 0x1000, scoped, tag = 'input window, operand 0, single buffered']
    #allocation3 [shape = 's32[1]{0}', space=sflag, size = 0x4, scoped, tag = 'scoped memory for tpu_custom_call.1']
    #allocation4 [shape = 's32[1]{0}', space=sflag, size = 0x4, scoped, tag = 'scoped memory for tpu_custom_call.1']
    #allocation5 [shape = 'u8[65536]{0}', space=vmem, size = 0x10000, scoped, tag = 'input window, operand 1, single buffered']
    #allocation6 [shape = 's32[1]{0}', space=sflag, size = 0x4, scoped, tag = 'scoped memory for tpu_custom_call.1']
    #allocation7 [shape = 'u8[65536]{0}', space=vmem, size = 0x10000, scoped, tag = 'input window, operand 3, single buffered']
    #allocation8 [shape = 'u8[65536]{0}', space=vmem, size = 0x10000, scoped, tag = 'input window, operand 5, single buffered']
    #allocation9 [shape = 's32[1]{0}', space=sflag, size = 0x4, scoped, tag = 'scoped memory for tpu_custom_call.1']
    #allocation10 [shape = 'u8[65536]{0}', space=vmem, size = 0x10000, scoped, tag = 'input window, operand 7, single buffered']
    #allocation11 [shape = 'u8[65536]{0}', space=vmem, size = 0x10000, scoped, tag = 'input window, operand 9, single buffered']
    #allocation12 [shape = 's32[1]{0}', space=sflag, size = 0x4, scoped, tag = 'scoped memory for tpu_custom_call.1']
    #allocation13 [shape = 'u8[65536]{0}', space=vmem, size = 0x10000, scoped, tag = 'input window, operand 11, single buffered']
    #allocation14 [shape = 'u8[65536]{0}', space=vmem, size = 0x10000, scoped, tag = 'input window, operand 13, single buffered']
    #allocation15 [shape = 's32[1]{0}', space=sflag, size = 0x4, scoped, tag = 'scoped memory for tpu_custom_call.1']
    #allocation16 [shape = 'u8[65536]{0}', space=vmem, size = 0x10000, scoped, tag = 'input window, operand 15, single buffered']
    #allocation17 [shape = 'u8[65536]{0}', space=vmem, size = 0x10000, scoped, tag = 'input window, operand 17, single buffered']
    #allocation18 [shape = 's32[1]{0}', space=sflag, size = 0x4, scoped, tag = 'scoped memory for tpu_custom_call.1']
    #allocation19 [shape = 'u8[4096]{0}', space=vmem, size = 0x1000, scoped, tag = 'output window, operand 0, single buffered']
    #allocation20 [shape = 'u8[4096]{0}', space=vmem, size = 0x1000, scoped, tag = 'output window, operand 1, single buffered']
    #allocation21 [shape = 's32[1]{0}', space=sflag, size = 0x4, scoped, tag = 'scoped memory for tpu_custom_call.1']
    %26 = vsyncpa [#allocation3], 0
    %27 = vsyncpa [#allocation6], 0
    %28 = vsyncpa [#allocation9], 0
    %29 = vsyncpa [#allocation12], 0
    %30 = vsyncpa [#allocation15], 0
    %31 = vsyncpa [#allocation18], 0
    %32 = vsyncpa [#allocation4], 0
    %33 = vsyncpa [#allocation21], 0
    // Predicated region
    $region2: #{tpu_custom_call.1} parent=1 // pred_check
      _
    $region3: #{tpu_custom_call.1} parent=1 // pred_check_branch
      %35 = sbr.rel (0) target = $region5
    $region4: #{tpu_custom_call.1} parent=1 // pred_region
      %37 = vsyncadd [#allocation3], 0
      %s39 = sshll.u32 %s0, 4
      %s40 = int_to_ptr.hbm [resolvable:$true] %s39
      %s41 = sshll.u32 [#allocation2], 4
      %s42 = int_to_ptr.vmem [resolvable:$true] %s41
      %44 = dma.hbm_to_vmem [thread:$0]  %s40, 128, %s42, [#allocation3]
    $region5: #{tpu_custom_call.1} parent=1 // pred_fallthru
      _
    // Predicated region
    $region6: #{tpu_custom_call.1} parent=1 // pred_check
      _
    $region7: #{tpu_custom_call.1} parent=1 // pred_check_branch
      %46 = sbr.rel (0) target = $region9
    $region8: #{tpu_custom_call.1} parent=1 // pred_region
      %48 = vsyncadd [#allocation6], 0
      %s49 = sshll.u32 %s1, 4
      %s50 = int_to_ptr.hbm [resolvable:$true] %s49
      %s51 = sshll.u32 [#allocation5], 4
      %s52 = int_to_ptr.vmem [resolvable:$true] %s51
      %57 = dma.hbm_to_vmem [thread:$0]  %s50, 2048, %s52, [#allocation6], 128, 128, 8
    $region9: #{tpu_custom_call.1} parent=1 // pred_fallthru
      _
    // Predicated region
    $region10: #{tpu_custom_call.1} parent=1 // pred_check
      _
    $region11: #{tpu_custom_call.1} parent=1 // pred_check_branch
      %59 = sbr.rel (0) target = $region13
    $region12: #{tpu_custom_call.1} parent=1 // pred_region
      _
    $region13: #{tpu_custom_call.1} parent=1 // pred_fallthru
      _
    // Predicated region
    $region14: #{tpu_custom_call.1} parent=1 // pred_check
      _
    $region15: #{tpu_custom_call.1} parent=1 // pred_check_branch
      %61 = sbr.rel (0) target = $region17
    $region16: #{tpu_custom_call.1} parent=1 // pred_region
      %63 = vsyncadd [#allocation6], 0
      %s64 = sshll.u32 %s3, 4
      %s65 = int_to_ptr.hbm [resolvable:$true] %s64
      %s66 = sshll.u32 [#allocation7], 4
      %s67 = int_to_ptr.vmem [resolvable:$true] %s66
      %72 = dma.hbm_to_vmem [thread:$0]  %s65, 2048, %s67, [#allocation6], 128, 128, 8
    $region17: #{tpu_custom_call.1} parent=1 // pred_fallthru
      _
    // Predicated region
    $region18: #{tpu_custom_call.1} parent=1 // pred_check
      _
    $region19: #{tpu_custom_call.1} parent=1 // pred_check_branch
      %74 = sbr.rel (0) target = $region21
    $region20: #{tpu_custom_call.1} parent=1 // pred_region
      _
    $region21: #{tpu_custom_call.1} parent=1 // pred_fallthru
      _
    // Predicated region
    $region22: #{tpu_custom_call.1} parent=1 // pred_check
      _
    $region23: #{tpu_custom_call.1} parent=1 // pred_check_branch
      %76 = sbr.rel (0) target = $region25
    $region24: #{tpu_custom_call.1} parent=1 // pred_region
      %78 = vsyncadd [#allocation9], 0
      %s79 = sshll.u32 %s5, 4
      %s80 = int_to_ptr.hbm [resolvable:$true] %s79
      %s81 = sshll.u32 [#allocation8], 4
      %s82 = int_to_ptr.vmem [resolvable:$true] %s81
      %87 = dma.hbm_to_vmem [thread:$0]  %s80, 2048, %s82, [#allocation9], 128, 128, 8
    $region25: #{tpu_custom_call.1} parent=1 // pred_fallthru
      _
    // Predicated region
    $region26: #{tpu_custom_call.1} parent=1 // pred_check
      _
    $region27: #{tpu_custom_call.1} parent=1 // pred_check_branch
      %89 = sbr.rel (0) target = $region29
    $region28: #{tpu_custom_call.1} parent=1 // pred_region
      _
    $region29: #{tpu_custom_call.1} parent=1 // pred_fallthru
      _
    // Predicated region
    $region30: #{tpu_custom_call.1} parent=1 // pred_check
      _
    $region31: #{tpu_custom_call.1} parent=1 // pred_check_branch
      %91 = sbr.rel (0) target = $region33
    $region32: #{tpu_custom_call.1} parent=1 // pred_region
      %93 = vsyncadd [#allocation9], 0
      %s94 = sshll.u32 %s7, 4
      %s95 = int_to_ptr.hbm [resolvable:$true] %s94
      %s96 = sshll.u32 [#allocation10], 4
      %s97 = int_to_ptr.vmem [resolvable:$true] %s96
      %102 = dma.hbm_to_vmem [thread:$0]  %s95, 2048, %s97, [#allocation9], 128, 128, 8
    $region33: #{tpu_custom_call.1} parent=1 // pred_fallthru
      _
    // Predicated region
    $region34: #{tpu_custom_call.1} parent=1 // pred_check
      _
    $region35: #{tpu_custom_call.1} parent=1 // pred_check_branch
      %104 = sbr.rel (0) target = $region37
    $region36: #{tpu_custom_call.1} parent=1 // pred_region
      _
    $region37: #{tpu_custom_call.1} parent=1 // pred_fallthru
      _
    // Predicated region
    $region38: #{tpu_custom_call.1} parent=1 // pred_check
      _
    $region39: #{tpu_custom_call.1} parent=1 // pred_check_branch
      %106 = sbr.rel (0) target = $region41
    $region40: #{tpu_custom_call.1} parent=1 // pred_region
      %108 = vsyncadd [#allocation12], 0
      %s109 = sshll.u32 %s9, 4
      %s110 = int_to_ptr.hbm [resolvable:$true] %s109
      %s111 = sshll.u32 [#allocation11], 4
      %s112 = int_to_ptr.vmem [resolvable:$true] %s111
      %117 = dma.hbm_to_vmem [thread:$0]  %s110, 2048, %s112, [#allocation12], 128, 128, 8
    $region41: #{tpu_custom_call.1} parent=1 // pred_fallthru
      _
    // Predicated region
    $region42: #{tpu_custom_call.1} parent=1 // pred_check
      _
    $region43: #{tpu_custom_call.1} parent=1 // pred_check_branch
      %119 = sbr.rel (0) target = $region45
    $region44: #{tpu_custom_call.1} parent=1 // pred_region
      _
    $region45: #{tpu_custom_call.1} parent=1 // pred_fallthru
      _
    // Predicated region
    $region46: #{tpu_custom_call.1} parent=1 // pred_check
      _
    $region47: #{tpu_custom_call.1} parent=1 // pred_check_branch
      %121 = sbr.rel (0) target = $region49
    $region48: #{tpu_custom_call.1} parent=1 // pred_region
      %123 = vsyncadd [#allocation12], 0
      %s124 = sshll.u32 %s11, 4
      %s125 = int_to_ptr.hbm [resolvable:$true] %s124
      %s126 = sshll.u32 [#allocation13], 4
      %s127 = int_to_ptr.vmem [resolvable:$true] %s126
      %132 = dma.hbm_to_vmem [thread:$0]  %s125, 2048, %s127, [#allocation12], 128, 128, 8
    $region49: #{tpu_custom_call.1} parent=1 // pred_fallthru
      _
    // Predicated region
    $region50: #{tpu_custom_call.1} parent=1 // pred_check
      _
    $region51: #{tpu_custom_call.1} parent=1 // pred_check_branch
      %134 = sbr.rel (0) target = $region53
    $region52: #{tpu_custom_call.1} parent=1 // pred_region
      _
    $region53: #{tpu_custom_call.1} parent=1 // pred_fallthru
      _
    // Predicated region
    $region54: #{tpu_custom_call.1} parent=1 // pred_check
      _
    $region55: #{tpu_custom_call.1} parent=1 // pred_check_branch
      %136 = sbr.rel (0) target = $region57
    $region56: #{tpu_custom_call.1} parent=1 // pred_region
      %138 = vsyncadd [#allocation15], 0
      %s139 = sshll.u32 %s13, 4
      %s140 = int_to_ptr.hbm [resolvable:$true] %s139
      %s141 = sshll.u32 [#allocation14], 4
      %s142 = int_to_ptr.vmem [resolvable:$true] %s141
      %147 = dma.hbm_to_vmem [thread:$0]  %s140, 2048, %s142, [#allocation15], 128, 128, 8
    $region57: #{tpu_custom_call.1} parent=1 // pred_fallthru
      _
    // Predicated region
    $region58: #{tpu_custom_call.1} parent=1 // pred_check
      _
    $region59: #{tpu_custom_call.1} parent=1 // pred_check_branch
      %149 = sbr.rel (0) target = $region61
    $region60: #{tpu_custom_call.1} parent=1 // pred_region
      _
    $region61: #{tpu_custom_call.1} parent=1 // pred_fallthru
      _
    // Predicated region
    $region62: #{tpu_custom_call.1} parent=1 // pred_check
      _
    $region63: #{tpu_custom_call.1} parent=1 // pred_check_branch
      %151 = sbr.rel (0) target = $region65
    $region64: #{tpu_custom_call.1} parent=1 // pred_region
      %153 = vsyncadd [#allocation15], 0
      %s154 = sshll.u32 %s15, 4
      %s155 = int_to_ptr.hbm [resolvable:$true] %s154
      %s156 = sshll.u32 [#allocation16], 4
      %s157 = int_to_ptr.vmem [resolvable:$true] %s156
      %162 = dma.hbm_to_vmem [thread:$0]  %s155, 2048, %s157, [#allocation15], 128, 128, 8
    $region65: #{tpu_custom_call.1} parent=1 // pred_fallthru
      _
    // Predicated region
    $region66: #{tpu_custom_call.1} parent=1 // pred_check
      _
    $region67: #{tpu_custom_call.1} parent=1 // pred_check_branch
      %164 = sbr.rel (0) target = $region69
    $region68: #{tpu_custom_call.1} parent=1 // pred_region
      _
    $region69: #{tpu_custom_call.1} parent=1 // pred_fallthru
      _
    // Predicated region
    $region70: #{tpu_custom_call.1} parent=1 // pred_check
      _
    $region71: #{tpu_custom_call.1} parent=1 // pred_check_branch
      %166 = sbr.rel (0) target = $region73
    $region72: #{tpu_custom_call.1} parent=1 // pred_region
      %168 = vsyncadd [#allocation18], 0
      %s169 = sshll.u32 %s17, 4
      %s170 = int_to_ptr.hbm [resolvable:$true] %s169
      %s171 = sshll.u32 [#allocation17], 4
      %s172 = int_to_ptr.vmem [resolvable:$true] %s171
      %177 = dma.hbm_to_vmem [thread:$0]  %s170, 2048, %s172, [#allocation18], 128, 128, 8
    $region73: #{tpu_custom_call.1} parent=1 // pred_fallthru
      _
    // Predicated region
    $region74: #{tpu_custom_call.1} parent=1 // pred_check
      _
    $region75: #{tpu_custom_call.1} parent=1 // pred_check_branch
      %179 = sbr.rel (0) target = $region77
    $region76: #{tpu_custom_call.1} parent=1 // pred_region
      _
    $region77: #{tpu_custom_call.1} parent=1 // pred_fallthru
      _
    // Predicated region
    $region78: #{tpu_custom_call.1} parent=1 // pred_check
      _
    $region79: #{tpu_custom_call.1} parent=1 // pred_check_branch
      %181 = sbr.rel (0) target = $region81
    $region80: #{tpu_custom_call.1} parent=1 // pred_region
      %183 = dma.done [#allocation3], 128
    $region81: #{tpu_custom_call.1} parent=1 // pred_fallthru
      _
    // Predicated region
    $region82: #{tpu_custom_call.1} parent=1 // pred_check
      _
    $region83: #{tpu_custom_call.1} parent=1 // pred_check_branch
      %185 = sbr.rel (0) target = $region85
    $region84: #{tpu_custom_call.1} parent=1 // pred_region
      %187 = dma.done [#allocation6], 2048
    $region85: #{tpu_custom_call.1} parent=1 // pred_fallthru
      _
    // Predicated region
    $region86: #{tpu_custom_call.1} parent=1 // pred_check
      _
    $region87: #{tpu_custom_call.1} parent=1 // pred_check_branch
      %189 = sbr.rel (0) target = $region89
    $region88: #{tpu_custom_call.1} parent=1 // pred_region
      %191 = dma.done [#allocation6], 2048
    $region89: #{tpu_custom_call.1} parent=1 // pred_fallthru
      _
    // Predicated region
    $region90: #{tpu_custom_call.1} parent=1 // pred_check
      _
    $region91: #{tpu_custom_call.1} parent=1 // pred_check_branch
      %193 = sbr.rel (0) target = $region93
    $region92: #{tpu_custom_call.1} parent=1 // pred_region
      %195 = dma.done [#allocation9], 2048
    $region93: #{tpu_custom_call.1} parent=1 // pred_fallthru
      _
    // Predicated region
    $region94: #{tpu_custom_call.1} parent=1 // pred_check
      _
    $region95: #{tpu_custom_call.1} parent=1 // pred_check_branch
      %197 = sbr.rel (0) target = $region97
    $region96: #{tpu_custom_call.1} parent=1 // pred_region
      %199 = dma.done [#allocation9], 2048
    $region97: #{tpu_custom_call.1} parent=1 // pred_fallthru
      _
    // Predicated region
    $region98: #{tpu_custom_call.1} parent=1 // pred_check
      _
    $region99: #{tpu_custom_call.1} parent=1 // pred_check_branch
      %201 = sbr.rel (0) target = $region101
    $region100: #{tpu_custom_call.1} parent=1 // pred_region
      %203 = dma.done [#allocation12], 2048
    $region101: #{tpu_custom_call.1} parent=1 // pred_fallthru
      _
    // Predicated region
    $region102: #{tpu_custom_call.1} parent=1 // pred_check
      _
    $region103: #{tpu_custom_call.1} parent=1 // pred_check_branch
      %205 = sbr.rel (0) target = $region105
    $region104: #{tpu_custom_call.1} parent=1 // pred_region
      %207 = dma.done [#allocation12], 2048
    $region105: #{tpu_custom_call.1} parent=1 // pred_fallthru
      _
    // Predicated region
    $region106: #{tpu_custom_call.1} parent=1 // pred_check
      _
    $region107: #{tpu_custom_call.1} parent=1 // pred_check_branch
      %209 = sbr.rel (0) target = $region109
    $region108: #{tpu_custom_call.1} parent=1 // pred_region
      %211 = dma.done [#allocation15], 2048
    $region109: #{tpu_custom_call.1} parent=1 // pred_fallthru
      _
    // Predicated region
    $region110: #{tpu_custom_call.1} parent=1 // pred_check
      _
    $region111: #{tpu_custom_call.1} parent=1 // pred_check_branch
      %213 = sbr.rel (0) target = $region113
    $region112: #{tpu_custom_call.1} parent=1 // pred_region
      %215 = dma.done [#allocation15], 2048
    $region113: #{tpu_custom_call.1} parent=1 // pred_fallthru
      _
    // Predicated region
    $region114: #{tpu_custom_call.1} parent=1 // pred_check
      _
    $region115: #{tpu_custom_call.1} parent=1 // pred_check_branch
      %217 = sbr.rel (0) target = $region117
    $region116: #{tpu_custom_call.1} parent=1 // pred_region
      %219 = dma.done [#allocation18], 2048
    $region117: #{tpu_custom_call.1} parent=1 // pred_fallthru
      _
    %v220 = vld [vmem:[#allocation2] sm:$0xff]
    %v221 = vld [vmem:[#allocation5] sm:$0xff]
    %v222 = vld [vmem:[#allocation5 + $0x8] sm:$0xff]
    %v223 = vld [vmem:[#allocation5 + $0x10] sm:$0xff]
    %v224 = vld [vmem:[#allocation5 + $0x18] sm:$0xff]
    %v225 = vld [vmem:[#allocation5 + $0x20] sm:$0xff]
    %v226 = vld [vmem:[#allocation5 + $0x28] sm:$0xff]
    %v227 = vld [vmem:[#allocation5 + $0x30] sm:$0xff]
    %v228 = vld [vmem:[#allocation5 + $0x38] sm:$0xff]
    %v229 = vld [vmem:[#allocation5 + $0x40] sm:$0xff]
    %v230 = vld [vmem:[#allocation5 + $0x48] sm:$0xff]
    %v231 = vld [vmem:[#allocation5 + $0x50] sm:$0xff]
    %v232 = vld [vmem:[#allocation5 + $0x58] sm:$0xff]
    %v233 = vld [vmem:[#allocation5 + $0x60] sm:$0xff]
    %v234 = vld [vmem:[#allocation5 + $0x68] sm:$0xff]
    %v235 = vld [vmem:[#allocation5 + $0x70] sm:$0xff]
    %v236 = vld [vmem:[#allocation5 + $0x78] sm:$0xff]
    %v237 = vld [vmem:[%s2] sm:$0x1]
    %v239 = vperm.slane %v237, 0
    %241 = vmatpush.msra.mxu0 %v236
    %242 = vmatpush.msra.mxu0 %v235
    %243 = vmatpush.msra.mxu0 %v234
    %244 = vmatpush.msra.mxu0 %v233
    %245 = vmatpush.msra.mxu0 %v232
    %246 = vmatpush.msra.mxu0 %v231
    %247 = vmatpush.msra.mxu0 %v230
    %248 = vmatpush.msra.mxu0 %v229
    %249 = vmatpush.msra.mxu0 %v228
    %250 = vmatpush.msra.mxu0 %v227
    %251 = vmatpush.msra.mxu0 %v226
    %252 = vmatpush.msra.mxu0 %v225
    %253 = vmatpush.msra.mxu0 %v224
    %254 = vmatpush.msra.mxu0 %v223
    %255 = vmatpush.msra.mxu0 %v222
    %256 = vmatpush.msra.mxu0 %v221
    %257 = vmatmul.f32.gmra.mxu0 %v220
    %v258 = vpop.f32.mrf.mxu0
    %v259 = vadd.f32 %v239, %v258
    %260 = vdwg.mxu0
    %v261 = vmax.f32 %v259, 0.0
    %v262 = vld [vmem:[#allocation7] sm:$0xff]
    %v263 = vld [vmem:[#allocation7 + $0x8] sm:$0xff]
    %v264 = vld [vmem:[#allocation7 + $0x10] sm:$0xff]
    %v265 = vld [vmem:[#allocation7 + $0x18] sm:$0xff]
    %v266 = vld [vmem:[#allocation7 + $0x20] sm:$0xff]
    %v267 = vld [vmem:[#allocation7 + $0x28] sm:$0xff]
    %v268 = vld [vmem:[#allocation7 + $0x30] sm:$0xff]
    %v269 = vld [vmem:[#allocation7 + $0x38] sm:$0xff]
    %v270 = vld [vmem:[#allocation7 + $0x40] sm:$0xff]
    %v271 = vld [vmem:[#allocation7 + $0x48] sm:$0xff]
    %v272 = vld [vmem:[#allocation7 + $0x50] sm:$0xff]
    %v273 = vld [vmem:[#allocation7 + $0x58] sm:$0xff]
    %v274 = vld [vmem:[#allocation7 + $0x60] sm:$0xff]
    %v275 = vld [vmem:[#allocation7 + $0x68] sm:$0xff]
    %v276 = vld [vmem:[#allocation7 + $0x70] sm:$0xff]
    %v277 = vld [vmem:[#allocation7 + $0x78] sm:$0xff]
    %v278 = vld [vmem:[%s4] sm:$0x1]
    %v280 = vperm.slane %v278, 0
    %282 = vmatpush.msra.mxu0 %v277
    %283 = vmatpush.msra.mxu0 %v276
    %284 = vmatpush.msra.mxu0 %v275
    %285 = vmatpush.msra.mxu0 %v274
    %286 = vmatpush.msra.mxu0 %v273
    %287 = vmatpush.msra.mxu0 %v272
    %288 = vmatpush.msra.mxu0 %v271
    %289 = vmatpush.msra.mxu0 %v270
    %290 = vmatpush.msra.mxu0 %v269
    %291 = vmatpush.msra.mxu0 %v268
    %292 = vmatpush.msra.mxu0 %v267
    %293 = vmatpush.msra.mxu0 %v266
    %294 = vmatpush.msra.mxu0 %v265
    %295 = vmatpush.msra.mxu0 %v264
    %296 = vmatpush.msra.mxu0 %v263
    %297 = vmatpush.msra.mxu0 %v262
    %298 = vmatmul.f32.gmra.mxu0 %v261
    %v299 = vpop.f32.mrf.mxu0
    %v300 = vadd.f32 %v280, %v299
    %301 = vdwg.mxu0
    %v302 = vmax.f32 %v300, 0.0
    %v303 = vld [vmem:[#allocation8] sm:$0xff]
    %v304 = vld [vmem:[#allocation8 + $0x8] sm:$0xff]
    %v305 = vld [vmem:[#allocation8 + $0x10] sm:$0xff]
    %v306 = vld [vmem:[#allocation8 + $0x18] sm:$0xff]
    %v307 = vld [vmem:[#allocation8 + $0x20] sm:$0xff]
    %v308 = vld [vmem:[#allocation8 + $0x28] sm:$0xff]
    %v309 = vld [vmem:[#allocation8 + $0x30] sm:$0xff]
    %v310 = vld [vmem:[#allocation8 + $0x38] sm:$0xff]
    %v311 = vld [vmem:[#allocation8 + $0x40] sm:$0xff]
    %v312 = vld [vmem:[#allocation8 + $0x48] sm:$0xff]
    %v313 = vld [vmem:[#allocation8 + $0x50] sm:$0xff]
    %v314 = vld [vmem:[#allocation8 + $0x58] sm:$0xff]
    %v315 = vld [vmem:[#allocation8 + $0x60] sm:$0xff]
    %v316 = vld [vmem:[#allocation8 + $0x68] sm:$0xff]
    %v317 = vld [vmem:[#allocation8 + $0x70] sm:$0xff]
    %v318 = vld [vmem:[#allocation8 + $0x78] sm:$0xff]
    %v319 = vld [vmem:[%s6] sm:$0x1]
    %v321 = vperm.slane %v319, 0
    %323 = vmatpush.msra.mxu0 %v318
    %324 = vmatpush.msra.mxu0 %v317
    %325 = vmatpush.msra.mxu0 %v316
    %326 = vmatpush.msra.mxu0 %v315
    %327 = vmatpush.msra.mxu0 %v314
    %328 = vmatpush.msra.mxu0 %v313
    %329 = vmatpush.msra.mxu0 %v312
    %330 = vmatpush.msra.mxu0 %v311
    %331 = vmatpush.msra.mxu0 %v310
    %332 = vmatpush.msra.mxu0 %v309
    %333 = vmatpush.msra.mxu0 %v308
    %334 = vmatpush.msra.mxu0 %v307
    %335 = vmatpush.msra.mxu0 %v306
    %336 = vmatpush.msra.mxu0 %v305
    %337 = vmatpush.msra.mxu0 %v304
    %338 = vmatpush.msra.mxu0 %v303
    %339 = vmatmul.f32.gmra.mxu0 %v302
    %v340 = vpop.f32.mrf.mxu0
    %v341 = vadd.f32 %v321, %v340
    %342 = vdwg.mxu0
    %v343 = vmax.f32 %v341, 0.0
    %v344 = vld [vmem:[#allocation10] sm:$0xff]
    %v345 = vld [vmem:[#allocation10 + $0x8] sm:$0xff]
    %v346 = vld [vmem:[#allocation10 + $0x10] sm:$0xff]
    %v347 = vld [vmem:[#allocation10 + $0x18] sm:$0xff]
    %v348 = vld [vmem:[#allocation10 + $0x20] sm:$0xff]
    %v349 = vld [vmem:[#allocation10 + $0x28] sm:$0xff]
    %v350 = vld [vmem:[#allocation10 + $0x30] sm:$0xff]
    %v351 = vld [vmem:[#allocation10 + $0x38] sm:$0xff]
    %v352 = vld [vmem:[#allocation10 + $0x40] sm:$0xff]
    %v353 = vld [vmem:[#allocation10 + $0x48] sm:$0xff]
    %v354 = vld [vmem:[#allocation10 + $0x50] sm:$0xff]
    %v355 = vld [vmem:[#allocation10 + $0x58] sm:$0xff]
    %v356 = vld [vmem:[#allocation10 + $0x60] sm:$0xff]
    %v357 = vld [vmem:[#allocation10 + $0x68] sm:$0xff]
    %v358 = vld [vmem:[#allocation10 + $0x70] sm:$0xff]
    %v359 = vld [vmem:[#allocation10 + $0x78] sm:$0xff]
    %v360 = vld [vmem:[%s8] sm:$0x1]
    %v362 = vperm.slane %v360, 0
    %364 = vmatpush.msra.mxu0 %v359
    %365 = vmatpush.msra.mxu0 %v358
    %366 = vmatpush.msra.mxu0 %v357
    %367 = vmatpush.msra.mxu0 %v356
    %368 = vmatpush.msra.mxu0 %v355
    %369 = vmatpush.msra.mxu0 %v354
    %370 = vmatpush.msra.mxu0 %v353
    %371 = vmatpush.msra.mxu0 %v352
    %372 = vmatpush.msra.mxu0 %v351
    %373 = vmatpush.msra.mxu0 %v350
    %374 = vmatpush.msra.mxu0 %v349
    %375 = vmatpush.msra.mxu0 %v348
    %376 = vmatpush.msra.mxu0 %v347
    %377 = vmatpush.msra.mxu0 %v346
    %378 = vmatpush.msra.mxu0 %v345
    %379 = vmatpush.msra.mxu0 %v344
    %380 = vmatmul.f32.gmra.mxu0 %v343
    %v381 = vpop.f32.mrf.mxu0
    %v382 = vadd.f32 %v362, %v381
    %383 = vdwg.mxu0
    %v384 = vld [vmem:[#allocation11] sm:$0xff]
    %v385 = vld [vmem:[#allocation11 + $0x8] sm:$0xff]
    %v386 = vld [vmem:[#allocation11 + $0x10] sm:$0xff]
    %v387 = vld [vmem:[#allocation11 + $0x18] sm:$0xff]
    %v388 = vld [vmem:[#allocation11 + $0x20] sm:$0xff]
    %v389 = vld [vmem:[#allocation11 + $0x28] sm:$0xff]
    %v390 = vld [vmem:[#allocation11 + $0x30] sm:$0xff]
    %v391 = vld [vmem:[#allocation11 + $0x38] sm:$0xff]
    %v392 = vld [vmem:[#allocation11 + $0x40] sm:$0xff]
    %v393 = vld [vmem:[#allocation11 + $0x48] sm:$0xff]
    %v394 = vld [vmem:[#allocation11 + $0x50] sm:$0xff]
    %v395 = vld [vmem:[#allocation11 + $0x58] sm:$0xff]
    %v396 = vld [vmem:[#allocation11 + $0x60] sm:$0xff]
    %v397 = vld [vmem:[#allocation11 + $0x68] sm:$0xff]
    %v398 = vld [vmem:[#allocation11 + $0x70] sm:$0xff]
    %v399 = vld [vmem:[#allocation11 + $0x78] sm:$0xff]
    %v400 = vld [vmem:[%s10] sm:$0x1]
    %v402 = vperm.slane %v400, 0
    %404 = vmatpush.msra.mxu0 %v399
    %405 = vmatpush.msra.mxu0 %v398
    %406 = vmatpush.msra.mxu0 %v397
    %407 = vmatpush.msra.mxu0 %v396
    %408 = vmatpush.msra.mxu0 %v395
    %409 = vmatpush.msra.mxu0 %v394
    %410 = vmatpush.msra.mxu0 %v393
    %411 = vmatpush.msra.mxu0 %v392
    %412 = vmatpush.msra.mxu0 %v391
    %413 = vmatpush.msra.mxu0 %v390
    %414 = vmatpush.msra.mxu0 %v389
    %415 = vmatpush.msra.mxu0 %v388
    %416 = vmatpush.msra.mxu0 %v387
    %417 = vmatpush.msra.mxu0 %v386
    %418 = vmatpush.msra.mxu0 %v385
    %419 = vmatpush.msra.mxu0 %v384
    %420 = vmatmul.f32.gmra.mxu0 %v382
    %v421 = vpop.f32.mrf.mxu0
    %v422 = vadd.f32 %v402, %v421
    %423 = vdwg.mxu0
    %v424 = vmax.f32 %v422, 0.0
    %v425 = vld [vmem:[#allocation13] sm:$0xff]
    %v426 = vld [vmem:[#allocation13 + $0x8] sm:$0xff]
    %v427 = vld [vmem:[#allocation13 + $0x10] sm:$0xff]
    %v428 = vld [vmem:[#allocation13 + $0x18] sm:$0xff]
    %v429 = vld [vmem:[#allocation13 + $0x20] sm:$0xff]
    %v430 = vld [vmem:[#allocation13 + $0x28] sm:$0xff]
    %v431 = vld [vmem:[#allocation13 + $0x30] sm:$0xff]
    %v432 = vld [vmem:[#allocation13 + $0x38] sm:$0xff]
    %v433 = vld [vmem:[#allocation13 + $0x40] sm:$0xff]
    %v434 = vld [vmem:[#allocation13 + $0x48] sm:$0xff]
    %v435 = vld [vmem:[#allocation13 + $0x50] sm:$0xff]
    %v436 = vld [vmem:[#allocation13 + $0x58] sm:$0xff]
    %v437 = vld [vmem:[#allocation13 + $0x60] sm:$0xff]
    %v438 = vld [vmem:[#allocation13 + $0x68] sm:$0xff]
    %v439 = vld [vmem:[#allocation13 + $0x70] sm:$0xff]
    %v440 = vld [vmem:[#allocation13 + $0x78] sm:$0xff]
    %v441 = vld [vmem:[%s12] sm:$0x1]
    %v443 = vperm.slane %v441, 0
    %445 = vmatpush.msra.mxu0 %v440
    %446 = vmatpush.msra.mxu0 %v439
    %447 = vmatpush.msra.mxu0 %v438
    %448 = vmatpush.msra.mxu0 %v437
    %449 = vmatpush.msra.mxu0 %v436
    %450 = vmatpush.msra.mxu0 %v435
    %451 = vmatpush.msra.mxu0 %v434
    %452 = vmatpush.msra.mxu0 %v433
    %453 = vmatpush.msra.mxu0 %v432
    %454 = vmatpush.msra.mxu0 %v431
    %455 = vmatpush.msra.mxu0 %v430
    %456 = vmatpush.msra.mxu0 %v429
    %457 = vmatpush.msra.mxu0 %v428
    %458 = vmatpush.msra.mxu0 %v427
    %459 = vmatpush.msra.mxu0 %v426
    %460 = vmatpush.msra.mxu0 %v425
    %461 = vmatmul.f32.gmra.mxu0 %v424
    %v462 = vpop.f32.mrf.mxu0
    %v463 = vadd.f32 %v443, %v462
    %464 = vdwg.mxu0
    %v465 = vmax.f32 %v463, 0.0
    %v466 = vld [vmem:[#allocation14] sm:$0xff]
    %v467 = vld [vmem:[#allocation14 + $0x8] sm:$0xff]
    %v468 = vld [vmem:[#allocation14 + $0x10] sm:$0xff]
    %v469 = vld [vmem:[#allocation14 + $0x18] sm:$0xff]
    %v470 = vld [vmem:[#allocation14 + $0x20] sm:$0xff]
    %v471 = vld [vmem:[#allocation14 + $0x28] sm:$0xff]
    %v472 = vld [vmem:[#allocation14 + $0x30] sm:$0xff]
    %v473 = vld [vmem:[#allocation14 + $0x38] sm:$0xff]
    %v474 = vld [vmem:[#allocation14 + $0x40] sm:$0xff]
    %v475 = vld [vmem:[#allocation14 + $0x48] sm:$0xff]
    %v476 = vld [vmem:[#allocation14 + $0x50] sm:$0xff]
    %v477 = vld [vmem:[#allocation14 + $0x58] sm:$0xff]
    %v478 = vld [vmem:[#allocation14 + $0x60] sm:$0xff]
    %v479 = vld [vmem:[#allocation14 + $0x68] sm:$0xff]
    %v480 = vld [vmem:[#allocation14 + $0x70] sm:$0xff]
    %v481 = vld [vmem:[#allocation14 + $0x78] sm:$0xff]
    %v482 = vld [vmem:[%s14] sm:$0x1]
    %v484 = vperm.slane %v482, 0
    %486 = vmatpush.msra.mxu0 %v481
    %487 = vmatpush.msra.mxu0 %v480
    %488 = vmatpush.msra.mxu0 %v479
    %489 = vmatpush.msra.mxu0 %v478
    %490 = vmatpush.msra.mxu0 %v477
    %491 = vmatpush.msra.mxu0 %v476
    %492 = vmatpush.msra.mxu0 %v475
    %493 = vmatpush.msra.mxu0 %v474
    %494 = vmatpush.msra.mxu0 %v473
    %495 = vmatpush.msra.mxu0 %v472
    %496 = vmatpush.msra.mxu0 %v471
    %497 = vmatpush.msra.mxu0 %v470
    %498 = vmatpush.msra.mxu0 %v469
    %499 = vmatpush.msra.mxu0 %v468
    %500 = vmatpush.msra.mxu0 %v467
    %501 = vmatpush.msra.mxu0 %v466
    %502 = vmatmul.f32.gmra.mxu0 %v465
    %v503 = vpop.f32.mrf.mxu0
    %v504 = vadd.f32 %v484, %v503
    %505 = vdwg.mxu0
    %v506 = vmax.f32 %v504, 0.0
    %v507 = vld [vmem:[#allocation16] sm:$0xff]
    %v508 = vld [vmem:[#allocation16 + $0x8] sm:$0xff]
    %v509 = vld [vmem:[#allocation16 + $0x10] sm:$0xff]
    %v510 = vld [vmem:[#allocation16 + $0x18] sm:$0xff]
    %v511 = vld [vmem:[#allocation16 + $0x20] sm:$0xff]
    %v512 = vld [vmem:[#allocation16 + $0x28] sm:$0xff]
    %v513 = vld [vmem:[#allocation16 + $0x30] sm:$0xff]
    %v514 = vld [vmem:[#allocation16 + $0x38] sm:$0xff]
    %v515 = vld [vmem:[#allocation16 + $0x40] sm:$0xff]
    %v516 = vld [vmem:[#allocation16 + $0x48] sm:$0xff]
    %v517 = vld [vmem:[#allocation16 + $0x50] sm:$0xff]
    %v518 = vld [vmem:[#allocation16 + $0x58] sm:$0xff]
    %v519 = vld [vmem:[#allocation16 + $0x60] sm:$0xff]
    %v520 = vld [vmem:[#allocation16 + $0x68] sm:$0xff]
    %v521 = vld [vmem:[#allocation16 + $0x70] sm:$0xff]
    %v522 = vld [vmem:[#allocation16 + $0x78] sm:$0xff]
    %v523 = vld [vmem:[%s16] sm:$0x1]
    %v525 = vperm.slane %v523, 0
    %527 = vmatpush.msra.mxu0 %v522
    %528 = vmatpush.msra.mxu0 %v521
    %529 = vmatpush.msra.mxu0 %v520
    %530 = vmatpush.msra.mxu0 %v519
    %531 = vmatpush.msra.mxu0 %v518
    %532 = vmatpush.msra.mxu0 %v517
    %533 = vmatpush.msra.mxu0 %v516
    %534 = vmatpush.msra.mxu0 %v515
    %535 = vmatpush.msra.mxu0 %v514
    %536 = vmatpush.msra.mxu0 %v513
    %537 = vmatpush.msra.mxu0 %v512
    %538 = vmatpush.msra.mxu0 %v511
    %539 = vmatpush.msra.mxu0 %v510
    %540 = vmatpush.msra.mxu0 %v509
    %541 = vmatpush.msra.mxu0 %v508
    %542 = vmatpush.msra.mxu0 %v507
    %543 = vmatmul.f32.gmra.mxu0 %v506
    %v544 = vpop.f32.mrf.mxu0
    %v545 = vadd.f32 %v525, %v544
    %546 = vdwg.mxu0
    %v547 = vxor.u32 %v545, 2147483648
    %v548 = vmul.f32 %v547, 1.442695
    %v549 = vpow.pop %v548
    %v550 = vadd.f32 %v549, 1.0
    %v551 = vrcp.pop %v550
    %v552 = vmul.f32 %v550, %v551
    %v553 = vsub.f32 1.0, %v552
    %v554 = vmul.f32 %v551, %v553
    %v555 = vadd.f32 %v551, %v554
    %vm556 = vweird.f32 %v550
    %vm557 = vweird.f32 %v551
    %vm558 = vmor %vm556, %vm557
    %v559 = vsel %vm558, %v551, %v555
    %v560 = vand.u32 2147483647, %v550
    %vm561 = vcmp.eq.f32.partialorder %v560, 8.507059e+37
    %v562 = vand.u32 %v550, 2147483648
    %v563 = vor.u32 1.1754944e-38, %v562
    %v564 = vsel %vm561, %v563, %v559
    %v565 = vmul.f32 1.0, %v564
    %566 = vst [vmem:[#allocation20] sm:$0xff] %v565
    %v567 = vld [vmem:[#allocation17] sm:$0xff]
    %v568 = vld [vmem:[#allocation17 + $0x8] sm:$0xff]
    %v569 = vld [vmem:[#allocation17 + $0x10] sm:$0xff]
    %v570 = vld [vmem:[#allocation17 + $0x18] sm:$0xff]
    %v571 = vld [vmem:[#allocation17 + $0x20] sm:$0xff]
    %v572 = vld [vmem:[#allocation17 + $0x28] sm:$0xff]
    %v573 = vld [vmem:[#allocation17 + $0x30] sm:$0xff]
    %v574 = vld [vmem:[#allocation17 + $0x38] sm:$0xff]
    %v575 = vld [vmem:[#allocation17 + $0x40] sm:$0xff]
    %v576 = vld [vmem:[#allocation17 + $0x48] sm:$0xff]
    %v577 = vld [vmem:[#allocation17 + $0x50] sm:$0xff]
    %v578 = vld [vmem:[#allocation17 + $0x58] sm:$0xff]
    %v579 = vld [vmem:[#allocation17 + $0x60] sm:$0xff]
    %v580 = vld [vmem:[#allocation17 + $0x68] sm:$0xff]
    %v581 = vld [vmem:[#allocation17 + $0x70] sm:$0xff]
    %v582 = vld [vmem:[#allocation17 + $0x78] sm:$0xff]
    %583 = vmatpush.msra.mxu0 %v582
    %584 = vmatpush.msra.mxu0 %v581
    %585 = vmatpush.msra.mxu0 %v580
    %586 = vmatpush.msra.mxu0 %v579
    %587 = vmatpush.msra.mxu0 %v578
    %588 = vmatpush.msra.mxu0 %v577
    %589 = vmatpush.msra.mxu0 %v576
    %590 = vmatpush.msra.mxu0 %v575
    %591 = vmatpush.msra.mxu0 %v574
    %592 = vmatpush.msra.mxu0 %v573
    %593 = vmatpush.msra.mxu0 %v572
    %594 = vmatpush.msra.mxu0 %v571
    %595 = vmatpush.msra.mxu0 %v570
    %596 = vmatpush.msra.mxu0 %v569
    %597 = vmatpush.msra.mxu0 %v568
    %598 = vmatpush.msra.mxu0 %v567
    %599 = vmatmul.f32.gmra.mxu0 %v382
    %v600 = vpop.f32.mrf.mxu0
    %v601 = vadd.f32 0.0, %v600
    %602 = vdwg.mxu0
    %v603 = vmul.f32 %v382, %v382
    %604 = vadd.xlane.f32.xlu0 %v603
    %v605 = vpop.xlane.xlu0 %604
    %v606 = vld [vmem:[%s18] sm:$0x1]
    %v608 = vperm.slane %v606, 0
    %v610 = vadd.f32 %v605, %v608
    %v611 = vmul.f32 %v601, 2.0
    %v612 = vsub.f32 %v610, %v611
    %v613 = vmax.f32 %v612, 0.0
    %v614 = vadd.f32 %v613, 1.0
    %v615 = vrcp.pop %v614
    %v616 = vmul.f32 %v614, %v615
    %v617 = vsub.f32 1.0, %v616
    %v618 = vmul.f32 %v615, %v617
    %v619 = vadd.f32 %v615, %v618
    %vm620 = vweird.f32 %v614
    %vm621 = vweird.f32 %v615
    %vm622 = vmor %vm620, %vm621
    %v623 = vsel %vm622, %v615, %v619
    %v624 = vand.u32 2147483647, %v614
    %vm625 = vcmp.eq.f32.partialorder %v624, 8.507059e+37
    %v626 = vand.u32 %v614, 2147483648
    %v627 = vor.u32 1.1754944e-38, %v626
    %v628 = vsel %vm625, %v627, %v623
    %v629 = vmul.f32 1.0, %v628
    %v630 = vmul.f32 %v629, %v629
    %631 = vadd.xlane.f32.xlu0 %v630
    %v632 = vpop.xlane.xlu0 %631
    %v633 = vrcp.pop %v632
    %v634 = vmul.f32 %v632, %v633
    %v635 = vsub.f32 1.0, %v634
    %v636 = vmul.f32 %v633, %v635
    %v637 = vadd.f32 %v633, %v636
    %vm638 = vweird.f32 %v632
    %vm639 = vweird.f32 %v633
    %vm640 = vmor %vm638, %vm639
    %v641 = vsel %vm640, %v633, %v637
    %v642 = vand.u32 2147483647, %v632
    %vm643 = vcmp.eq.f32.partialorder %v642, 8.507059e+37
    %v644 = vand.u32 %v632, 2147483648
    %v645 = vor.u32 1.1754944e-38, %v644
    %v646 = vsel %vm643, %v645, %v641
    %v647 = vmul.f32 %v630, %v646
    %648 = vst [vmem:[#allocation19] sm:$0xff] %v647
    // Predicated region
    $region118: #{tpu_custom_call.1} parent=1 // pred_check
      _
    $region119: #{tpu_custom_call.1} parent=1 // pred_check_branch
      %650 = sbr.rel (0) target = $region121
    $region120: #{tpu_custom_call.1} parent=1 // pred_region
      %652 = vsyncadd [#allocation4], 0
      %s654 = sshll.u32 [#allocation19], 4
      %s655 = int_to_ptr.vmem [resolvable:$true] %s654
      %s656 = sshll.u32 %s19, 4
      %s657 = int_to_ptr.hbm [resolvable:$true] %s656
      %659 = dma.vmem_to_hbm [thread:$0]  %s655, 128, %s657, [#allocation4]
    $region121: #{tpu_custom_call.1} parent=1 // pred_fallthru
      _
    // Predicated region
    $region122: #{tpu_custom_call.1} parent=1 // pred_check
      _
    $region123: #{tpu_custom_call.1} parent=1 // pred_check_branch
      %661 = sbr.rel (0) target = $region125
    $region124: #{tpu_custom_call.1} parent=1 // pred_region
      %663 = vsyncadd [#allocation21], 0
      %s665 = sshll.u32 [#allocation20], 4
      %s666 = int_to_ptr.vmem [resolvable:$true] %s665
      %s667 = sshll.u32 %s20, 4
      %s668 = int_to_ptr.hbm [resolvable:$true] %s667
      %670 = dma.vmem_to_hbm [thread:$0]  %s666, 128, %s668, [#allocation21]
    $region125: #{tpu_custom_call.1} parent=1 // pred_fallthru
      _
    // Predicated region
    $region126: #{tpu_custom_call.1} parent=1 // pred_check
      _
    $region127: #{tpu_custom_call.1} parent=1 // pred_check_branch
      %672 = sbr.rel (0) target = $region129
    $region128: #{tpu_custom_call.1} parent=1 // pred_region
      %674 = dma.done [#allocation4], 128
    $region129: #{tpu_custom_call.1} parent=1 // pred_fallthru
      _
    // Predicated region
    $region130: #{tpu_custom_call.1} parent=1 // pred_check
      _
    $region131: #{tpu_custom_call.1} parent=1 // pred_check_branch
      %676 = sbr.rel (0) target = $region133
    $region132: #{tpu_custom_call.1} parent=1 // pred_region
      %678 = dma.done [#allocation21], 128
    $region133: #{tpu_custom_call.1} parent=1 // pred_fallthru
      _
    %679 = vsyncpa [#allocation3], 1
    %680 = vsyncpa [#allocation6], 1
    %681 = vsyncpa [#allocation9], 1
    %682 = vsyncpa [#allocation12], 1
    %683 = vsyncpa [#allocation15], 1
    %684 = vsyncpa [#allocation18], 1
    %685 = vsyncpa [#allocation4], 1
    %686 = vsyncpa [#allocation21], 1

</llo_original>
